<compile_context>
chip_gen: v6e
topology: v6e:2x2x1
jax: 0.10.0
libtpu: 0.0.40
codegen_flags: <defaults>
</compile_context>

<pallas_src>
import functools

import jax
import jax.numpy as jnp
from jax.experimental import pallas as pl
from jax.experimental.pallas import tpu as pltpu


def _conv3x3_kernel(x_ref, w_ref, b_ref, o_ref, *, NB, C_in, M, H, W):
    """3x3 'same' conv for one batch group, lane-dense, register-resident.

    x_ref: (NB, C_in, H*W)   flattened NCHW activations for this batch group
    w_ref: (9, M, C_in)      tap-major weights, tap t = kh*3 + kw
    b_ref: (M, 1)            biases (M = n_heads * C_out)
    o_ref: (NB, M, H*W)      fused per-head outputs (heads stacked on channels)
    """
    HW = H * W
    L = NB * HW

    # Fold the batch group into the lane axis: (NB, C_in, HW) -> (C_in, NB*HW).
    # Each piece is a 128-aligned lane slab, so this is pure vreg placement.
    if NB == 1:
        x_wide = x_ref[0]
    else:
        x_wide = jnp.concatenate([x_ref[n] for n in range(NB)], axis=1)

    # Border masks, computed once (per-image coordinates from the global lane).
    lane = jax.lax.broadcasted_iota(jnp.int32, (1, L), 1)
    p = lane % HW                      # position within an image
    col = lane % W                     # column within a row
    top_ok = p >= W
    bot_ok = p < HW - W
    left_ok = col >= 1
    right_ok = col < W - 1

    # 9 tap-accumulation matmuls: acc += w_tap (M, C_in) @ tap (C_in, NB*HW).
    acc = None
    for kh in range(3):
        for kw in range(3):
            dh, dw = kh - 1, kw - 1
            t = kh * 3 + kw
            s = dh * W + dw                                  # flattened src offset
            tap = x_wide if s == 0 else pltpu.roll(x_wide, (-s) % L, axis=1)
            masks = []
            if dh < 0:
                masks.append(top_ok)
            elif dh > 0:
                masks.append(bot_ok)
            if dw < 0:
                masks.append(left_ok)
            elif dw > 0:
                masks.append(right_ok)
            if masks:
                valid = functools.reduce(jnp.logical_and, masks)
                tap = jnp.where(valid, tap, 0.0)
            part = jnp.dot(w_ref[t], tap, preferred_element_type=jnp.float32)
            acc = part if acc is None else acc + part

    res = acc + b_ref[...].astype(jnp.float32)               # (M, NB*HW)

    # Lane-dense stores: one full (M, HW) slab per image, 256-aligned lane slices.
    for n in range(NB):
        o_ref[n] = res[:, n * HW:(n + 1) * HW].astype(o_ref.dtype)


def _conv3x3_forward(x_nchw, w_taps, b_all):
    """Fused batched 3x3 padding=1 conv(s) (nn.Conv2d semantics).

    x_nchw: (N, C_in, H, W) float32
    w_taps: (9, M, C_in)    tap-major packed weights (M = n_heads * C_out)
    b_all:  (M, 1)          packed biases
    returns (N, M, H*W) float32
    """
    N, C_in, H, W = x_nchw.shape
    M = w_taps.shape[1]
    HW = H * W

    # Batch-group size: largest divisor of N keeping the RHS lane slab <= ~2048
    # lanes.  At the test size (N=2, HW=256) the whole batch fits one grid step;
    # larger N turns into a 'parallel' grid (second TC on v7x) with a tiny
    # per-step working set (no im2col expansion).
    NB = 1
    for d in range(1, N + 1):
        if N % d == 0 and d * HW <= max(HW, 2048):
            NB = d
    grid = (N // NB,)

    x3 = x_nchw.reshape(N, C_in, HW)                          # free reshape

    kernel = functools.partial(_conv3x3_kernel, NB=NB, C_in=C_in, M=M, H=H, W=W)

    out = pl.pallas_call(
        kernel,
        out_shape=jax.ShapeDtypeStruct((N, M, HW), jnp.float32),
        grid_spec=pltpu.PrefetchScalarGridSpec(
            num_scalar_prefetch=0,
            grid=grid,
            in_specs=[
                pl.BlockSpec((NB, C_in, HW), lambda g: (g, 0, 0)),
                pl.BlockSpec((9, M, C_in), lambda g: (0, 0, 0)),
                pl.BlockSpec((M, 1), lambda g: (0, 0)),
            ],
            out_specs=pl.BlockSpec((NB, M, HW), lambda g: (g, 0, 0)),
        ),
        compiler_params=pltpu.CompilerParams(
            dimension_semantics=("parallel",)),
        cost_estimate=pl.CostEstimate(
            flops=2 * N * M * 9 * C_in * HW,
            transcendentals=0,
            bytes_accessed=4 * (N * C_in * HW + N * M * HW + 9 * M * C_in + M)),
    )(x3, w_taps, b_all)
    return out


def _pack_params(weights, biases):
    """OIHW conv weights -> (9, M, C_in) tap-major (t = kh*3+kw); biases -> (M,1)."""
    w_taps = jnp.concatenate(
        [w.transpose(2, 3, 0, 1).reshape(9, w.shape[0], w.shape[1])
         for w in weights], axis=1)
    b_all = jnp.concatenate([b.reshape(-1, 1) for b in biases], axis=0)
    return w_taps, b_all


class ModelWithParams:
    """JAX/Pallas re-implementation of the PyTorch ModelWithParams."""

    def __init__(self, i=0, f=0.0, s='', b=True, num=0, *, key=None):
        self.num = num
        self.has_convs = (i == 0 and f == 0.0 and s == '' and b)
        self._w_taps = None
        self._b_all = None
        if self.has_convs:
            if key is None:
                key = jax.random.PRNGKey(0)
            k1, k2, k3, k4 = jax.random.split(key, 4)
            bound = 1.0 / jnp.sqrt(3.0 * 3.0 * 3.0)   # PyTorch-like fan_in bound
            self.conv1_w = jax.random.uniform(k1, (3, 3, 3, 3), jnp.float32, -bound, bound)
            self.conv1_b = jax.random.uniform(k2, (3,), jnp.float32, -bound, bound)
            self.conv2_w = jax.random.uniform(k3, (3, 3, 3, 3), jnp.float32, -bound, bound)
            self.conv2_b = jax.random.uniform(k4, (3,), jnp.float32, -bound, bound)
            # Hoist weight/bias repacking out of the per-call path.
            if num == 0:
                self._w_taps, self._b_all = _pack_params((self.conv1_w,), (self.conv1_b,))
            elif num == 1:
                self._w_taps, self._b_all = _pack_params((self.conv2_w,), (self.conv2_b,))
            elif num == 2:
                self._w_taps, self._b_all = _pack_params(
                    (self.conv1_w, self.conv2_w), (self.conv1_b, self.conv2_b))

    def __call__(self, x):
        if not self.has_convs:
            return None   # TODO(synk): PyTorch would raise AttributeError here (convs absent).
        if self.num not in (0, 1, 2):
            return None   # matches PyTorch forward for other num values
        N, _, H, W = x.shape
        C_out = 3
        out = _conv3x3_forward(x, self._w_taps, self._b_all)   # (N, M, H*W)
        if self.num in (0, 1):
            return out.reshape(N, C_out, H, W)
        x1 = out[:, :C_out, :].reshape(N, C_out, H, W)          # cheap channel slice
        x2 = out[:, C_out:, :].reshape(N, C_out, H, W)
        return (x1, x2)


if __name__ == "__main__":
    key = jax.random.PRNGKey(0)
    k_x, k_params = jax.random.split(key)

    # Small shapes implied by the module: Conv2d(3, 3) -> N=2, C=3, H=W=16.
    x = jax.random.normal(k_x, (2, 3, 16, 16), dtype=jnp.float32)

    def conv_ref(w, b):
        return jax.lax.conv_general_dilated(
            x, w, window_strides=(1, 1), padding="SAME",
            dimension_numbers=("NCHW", "OIHW", "NCHW")) + b.reshape(1, 3, 1, 1)

    # num=0 (default): forward = conv1(x)
    model0 = ModelWithParams(key=k_params)
    out0 = jax.block_until_ready(model0(x))
    assert out0.shape == (2, 3, 16, 16)
    assert jnp.allclose(out0, conv_ref(model0.conv1_w, model0.conv1_b),
                        atol=1e-4, rtol=1e-4)

    # num=1: forward = conv2(x)
    model1 = ModelWithParams(num=1, key=k_params)
    out1 = jax.block_until_ready(model1(x))
    assert jnp.allclose(out1, conv_ref(model1.conv2_w, model1.conv2_b),
                        atol=1e-4, rtol=1e-4)

    # num=2: both convs fused into a single pallas_call
    model2 = ModelWithParams(num=2, key=k_params)
    x1, x2 = jax.block_until_ready(model2(x))
    assert jnp.allclose(x1, conv_ref(model2.conv1_w, model2.conv1_b),
                        atol=1e-4, rtol=1e-4)
    assert jnp.allclose(x2, conv_ref(model2.conv2_w, model2.conv2_b),
                        atol=1e-4, rtol=1e-4)

    print("KERNEL_OK")
</pallas_src>

<mosaic_0001>
module attributes {stable_mosaic.version = 11 : i64} {
  func.func @_conv3x3_kernel(%arg0: i32, %arg1: memref<2x3x256xf32, #tpu.memory_space<vmem>>, %arg2: memref<9x3x3xf32, #tpu.memory_space<vmem>>, %arg3: memref<3x1xf32, #tpu.memory_space<vmem>>, %arg4: memref<2x3x256xf32, #tpu.memory_space<vmem>>) attributes {dimension_semantics = [#tpu.dimension_semantics<parallel>], iteration_bounds = array<i64: 1>, scalar_prefetch = 0 : i64, scratch_operands = 0 : i64, tpu.core_type = #tpu.core_type<tc>, window_params = [{transform_indices = @transform_0, window_bounds = array<i64: 2, 3, 256>}, {pipeline_mode = #tpu.pipeline_mode<synchronous>, transform_indices = @transform_1, window_bounds = array<i64: 9, 3, 3>}, {pipeline_mode = #tpu.pipeline_mode<synchronous>, transform_indices = @transform_2, window_bounds = array<i64: 3, 1>}, {transform_indices = @transform_3, window_bounds = array<i64: 2, 3, 256>}]} {
    %c0 = arith.constant 0 : index
    %c0_0 = arith.constant 0 : index
    %c0_1 = arith.constant 0 : index
    %0 = vector.load %arg1[%c0, %c0_0, %c0_1] : memref<2x3x256xf32, #tpu.memory_space<vmem>>, vector<1x3x256xf32>
    %1 = vector.shape_cast %0 : vector<1x3x256xf32> to vector<3x256xf32>
    %c1 = arith.constant 1 : index
    %c0_2 = arith.constant 0 : index
    %c0_3 = arith.constant 0 : index
    %2 = vector.load %arg1[%c1, %c0_2, %c0_3] : memref<2x3x256xf32, #tpu.memory_space<vmem>>, vector<1x3x256xf32>
    %3 = vector.shape_cast %2 : vector<1x3x256xf32> to vector<3x256xf32>
    %4 = tpu.concatenate %1, %3 in 1 : vector<3x256xf32>, vector<3x256xf32> -> vector<3x512xf32>
    %5 = tpu.iota {dimensions = array<i32: 1>} : vector<1x512xi32>
    %c256_i32 = arith.constant 256 : i32
    %c0_i32 = arith.constant 0 : i32
    %6 = arith.cmpi eq, %c256_i32, %c0_i32 : i32
    %c1_i32 = arith.constant 1 : i32
    %7 = arith.select %6, %c1_i32, %c256_i32 : i32
    %8 = vector.broadcast %7 : i32 to vector<1x512xi32>
    %9 = arith.remsi %5, %8 : vector<1x512xi32>
    %c0_i32_4 = arith.constant 0 : i32
    %10 = vector.broadcast %c0_i32_4 : i32 to vector<1x512xi32>
    %11 = arith.cmpi ne, %9, %10 : vector<1x512xi32>
    %c0_i32_5 = arith.constant 0 : i32
    %12 = vector.broadcast %c0_i32_5 : i32 to vector<1x512xi32>
    %13 = arith.cmpi slt, %9, %12 : vector<1x512xi32>
    %c0_i32_6 = arith.constant 0 : i32
    %14 = arith.cmpi slt, %7, %c0_i32_6 : i32
    %15 = vector.broadcast %14 : i1 to vector<1x512xi1>
    %16 = vector.broadcast %15 : vector<1x512xi1> to vector<1x512xi1>
    %17 = arith.xori %13, %16 : vector<1x512xi1>
    %18 = arith.andi %17, %11 : vector<1x512xi1>
    %19 = vector.broadcast %7 : i32 to vector<1x512xi32>
    %20 = arith.addi %9, %19 : vector<1x512xi32>
    %21 = arith.select %18, %20, %9 : vector<1x512xi1>, vector<1x512xi32>
    %c16_i32 = arith.constant 16 : i32
    %c0_i32_7 = arith.constant 0 : i32
    %22 = arith.cmpi eq, %c16_i32, %c0_i32_7 : i32
    %c1_i32_8 = arith.constant 1 : i32
    %23 = arith.select %22, %c1_i32_8, %c16_i32 : i32
    %24 = vector.broadcast %23 : i32 to vector<1x512xi32>
    %25 = arith.remsi %5, %24 : vector<1x512xi32>
    %c0_i32_9 = arith.constant 0 : i32
    %26 = vector.broadcast %c0_i32_9 : i32 to vector<1x512xi32>
    %27 = arith.cmpi ne, %25, %26 : vector<1x512xi32>
    %c0_i32_10 = arith.constant 0 : i32
    %28 = vector.broadcast %c0_i32_10 : i32 to vector<1x512xi32>
    %29 = arith.cmpi slt, %25, %28 : vector<1x512xi32>
    %c0_i32_11 = arith.constant 0 : i32
    %30 = arith.cmpi slt, %23, %c0_i32_11 : i32
    %31 = vector.broadcast %30 : i1 to vector<1x512xi1>
    %32 = vector.broadcast %31 : vector<1x512xi1> to vector<1x512xi1>
    %33 = arith.xori %29, %32 : vector<1x512xi1>
    %34 = arith.andi %33, %27 : vector<1x512xi1>
    %35 = vector.broadcast %23 : i32 to vector<1x512xi32>
    %36 = arith.addi %25, %35 : vector<1x512xi32>
    %37 = arith.select %34, %36, %25 : vector<1x512xi1>, vector<1x512xi32>
    %c16_i32_12 = arith.constant 16 : i32
    %38 = vector.broadcast %c16_i32_12 : i32 to vector<1x512xi32>
    %39 = arith.cmpi sge, %21, %38 : vector<1x512xi32>
    %c240_i32 = arith.constant 240 : i32
    %40 = vector.broadcast %c240_i32 : i32 to vector<1x512xi32>
    %41 = arith.cmpi slt, %21, %40 : vector<1x512xi32>
    %c1_i32_13 = arith.constant 1 : i32
    %42 = vector.broadcast %c1_i32_13 : i32 to vector<1x512xi32>
    %43 = arith.cmpi sge, %37, %42 : vector<1x512xi32>
    %c15_i32 = arith.constant 15 : i32
    %44 = vector.broadcast %c15_i32 : i32 to vector<1x512xi32>
    %45 = arith.cmpi slt, %37, %44 : vector<1x512xi32>
    %c17_i32 = arith.constant 17 : i32
    %46 = tpu.dynamic_rotate %4 by %c17_i32 dim 1 : vector<3x512xf32>, i32 -> vector<3x512xf32>
    %47 = arith.andi %39, %43 : vector<1x512xi1>
    %cst = arith.constant 0.000000e+00 : f32
    %48 = vector.shape_cast %47 : vector<1x512xi1> to vector<1x512xi1>
    %49 = vector.broadcast %48 : vector<1x512xi1> to vector<3x512xi1>
    %50 = vector.broadcast %cst : f32 to vector<3x512xf32>
    %51 = arith.select %49, %46, %50 : vector<3x512xi1>, vector<3x512xf32>
    %c0_14 = arith.constant 0 : index
    %c0_15 = arith.constant 0 : index
    %c0_16 = arith.constant 0 : index
    %52 = vector.load %arg2[%c0_14, %c0_15, %c0_16] : memref<9x3x3xf32, #tpu.memory_space<vmem>>, vector<1x3x3xf32>
    %53 = vector.shape_cast %52 : vector<1x3x3xf32> to vector<3x3xf32>
    %cst_17 = arith.constant dense<0.000000e+00> : vector<3x512xf32>
    %54 = tpu.matmul %53, %51, %cst_17 {dimension_numbers = #tpu.dot_dimension_numbers<[1], [0], [0], [1], [0, 0, 1, 1], [], []>} : vector<3x3xf32>, vector<3x512xf32>, vector<3x512xf32> -> vector<3x512xf32>
    %c16_i32_18 = arith.constant 16 : i32
    %55 = tpu.dynamic_rotate %4 by %c16_i32_18 dim 1 : vector<3x512xf32>, i32 -> vector<3x512xf32>
    %cst_19 = arith.constant 0.000000e+00 : f32
    %56 = vector.shape_cast %39 : vector<1x512xi1> to vector<1x512xi1>
    %57 = vector.broadcast %56 : vector<1x512xi1> to vector<3x512xi1>
    %58 = vector.broadcast %cst_19 : f32 to vector<3x512xf32>
    %59 = arith.select %57, %55, %58 : vector<3x512xi1>, vector<3x512xf32>
    %c1_20 = arith.constant 1 : index
    %c0_21 = arith.constant 0 : index
    %c0_22 = arith.constant 0 : index
    %60 = vector.load %arg2[%c1_20, %c0_21, %c0_22] : memref<9x3x3xf32, #tpu.memory_space<vmem>>, vector<1x3x3xf32>
    %61 = vector.shape_cast %60 : vector<1x3x3xf32> to vector<3x3xf32>
    %cst_23 = arith.constant dense<0.000000e+00> : vector<3x512xf32>
    %62 = tpu.matmul %61, %59, %cst_23 {dimension_numbers = #tpu.dot_dimension_numbers<[1], [0], [0], [1], [0, 0, 1, 1], [], []>} : vector<3x3xf32>, vector<3x512xf32>, vector<3x512xf32> -> vector<3x512xf32>
    %63 = arith.addf %54, %62 : vector<3x512xf32>
    %c15_i32_24 = arith.constant 15 : i32
    %64 = tpu.dynamic_rotate %4 by %c15_i32_24 dim 1 : vector<3x512xf32>, i32 -> vector<3x512xf32>
    %65 = arith.andi %39, %45 : vector<1x512xi1>
    %cst_25 = arith.constant 0.000000e+00 : f32
    %66 = vector.shape_cast %65 : vector<1x512xi1> to vector<1x512xi1>
    %67 = vector.broadcast %66 : vector<1x512xi1> to vector<3x512xi1>
    %68 = vector.broadcast %cst_25 : f32 to vector<3x512xf32>
    %69 = arith.select %67, %64, %68 : vector<3x512xi1>, vector<3x512xf32>
    %c2 = arith.constant 2 : index
    %c0_26 = arith.constant 0 : index
    %c0_27 = arith.constant 0 : index
    %70 = vector.load %arg2[%c2, %c0_26, %c0_27] : memref<9x3x3xf32, #tpu.memory_space<vmem>>, vector<1x3x3xf32>
    %71 = vector.shape_cast %70 : vector<1x3x3xf32> to vector<3x3xf32>
    %cst_28 = arith.constant dense<0.000000e+00> : vector<3x512xf32>
    %72 = tpu.matmul %71, %69, %cst_28 {dimension_numbers = #tpu.dot_dimension_numbers<[1], [0], [0], [1], [0, 0, 1, 1], [], []>} : vector<3x3xf32>, vector<3x512xf32>, vector<3x512xf32> -> vector<3x512xf32>
    %73 = arith.addf %63, %72 : vector<3x512xf32>
    %c1_i32_29 = arith.constant 1 : i32
    %74 = tpu.dynamic_rotate %4 by %c1_i32_29 dim 1 : vector<3x512xf32>, i32 -> vector<3x512xf32>
    %cst_30 = arith.constant 0.000000e+00 : f32
    %75 = vector.shape_cast %43 : vector<1x512xi1> to vector<1x512xi1>
    %76 = vector.broadcast %75 : vector<1x512xi1> to vector<3x512xi1>
    %77 = vector.broadcast %cst_30 : f32 to vector<3x512xf32>
    %78 = arith.select %76, %74, %77 : vector<3x512xi1>, vector<3x512xf32>
    %c3 = arith.constant 3 : index
    %c0_31 = arith.constant 0 : index
    %c0_32 = arith.constant 0 : index
    %79 = vector.load %arg2[%c3, %c0_31, %c0_32] : memref<9x3x3xf32, #tpu.memory_space<vmem>>, vector<1x3x3xf32>
    %80 = vector.shape_cast %79 : vector<1x3x3xf32> to vector<3x3xf32>
    %cst_33 = arith.constant dense<0.000000e+00> : vector<3x512xf32>
    %81 = tpu.matmul %80, %78, %cst_33 {dimension_numbers = #tpu.dot_dimension_numbers<[1], [0], [0], [1], [0, 0, 1, 1], [], []>} : vector<3x3xf32>, vector<3x512xf32>, vector<3x512xf32> -> vector<3x512xf32>
    %82 = arith.addf %73, %81 : vector<3x512xf32>
    %c4 = arith.constant 4 : index
    %c0_34 = arith.constant 0 : index
    %c0_35 = arith.constant 0 : index
    %83 = vector.load %arg2[%c4, %c0_34, %c0_35] : memref<9x3x3xf32, #tpu.memory_space<vmem>>, vector<1x3x3xf32>
    %84 = vector.shape_cast %83 : vector<1x3x3xf32> to vector<3x3xf32>
    %cst_36 = arith.constant dense<0.000000e+00> : vector<3x512xf32>
    %85 = tpu.matmul %84, %4, %cst_36 {dimension_numbers = #tpu.dot_dimension_numbers<[1], [0], [0], [1], [0, 0, 1, 1], [], []>} : vector<3x3xf32>, vector<3x512xf32>, vector<3x512xf32> -> vector<3x512xf32>
    %86 = arith.addf %82, %85 : vector<3x512xf32>
    %c511_i32 = arith.constant 511 : i32
    %87 = tpu.dynamic_rotate %4 by %c511_i32 dim 1 : vector<3x512xf32>, i32 -> vector<3x512xf32>
    %cst_37 = arith.constant 0.000000e+00 : f32
    %88 = vector.shape_cast %45 : vector<1x512xi1> to vector<1x512xi1>
    %89 = vector.broadcast %88 : vector<1x512xi1> to vector<3x512xi1>
    %90 = vector.broadcast %cst_37 : f32 to vector<3x512xf32>
    %91 = arith.select %89, %87, %90 : vector<3x512xi1>, vector<3x512xf32>
    %c5 = arith.constant 5 : index
    %c0_38 = arith.constant 0 : index
    %c0_39 = arith.constant 0 : index
    %92 = vector.load %arg2[%c5, %c0_38, %c0_39] : memref<9x3x3xf32, #tpu.memory_space<vmem>>, vector<1x3x3xf32>
    %93 = vector.shape_cast %92 : vector<1x3x3xf32> to vector<3x3xf32>
    %cst_40 = arith.constant dense<0.000000e+00> : vector<3x512xf32>
    %94 = tpu.matmul %93, %91, %cst_40 {dimension_numbers = #tpu.dot_dimension_numbers<[1], [0], [0], [1], [0, 0, 1, 1], [], []>} : vector<3x3xf32>, vector<3x512xf32>, vector<3x512xf32> -> vector<3x512xf32>
    %95 = arith.addf %86, %94 : vector<3x512xf32>
    %c497_i32 = arith.constant 497 : i32
    %96 = tpu.dynamic_rotate %4 by %c497_i32 dim 1 : vector<3x512xf32>, i32 -> vector<3x512xf32>
    %97 = arith.andi %41, %43 : vector<1x512xi1>
    %cst_41 = arith.constant 0.000000e+00 : f32
    %98 = vector.shape_cast %97 : vector<1x512xi1> to vector<1x512xi1>
    %99 = vector.broadcast %98 : vector<1x512xi1> to vector<3x512xi1>
    %100 = vector.broadcast %cst_41 : f32 to vector<3x512xf32>
    %101 = arith.select %99, %96, %100 : vector<3x512xi1>, vector<3x512xf32>
    %c6 = arith.constant 6 : index
    %c0_42 = arith.constant 0 : index
    %c0_43 = arith.constant 0 : index
    %102 = vector.load %arg2[%c6, %c0_42, %c0_43] : memref<9x3x3xf32, #tpu.memory_space<vmem>>, vector<1x3x3xf32>
    %103 = vector.shape_cast %102 : vector<1x3x3xf32> to vector<3x3xf32>
    %cst_44 = arith.constant dense<0.000000e+00> : vector<3x512xf32>
    %104 = tpu.matmul %103, %101, %cst_44 {dimension_numbers = #tpu.dot_dimension_numbers<[1], [0], [0], [1], [0, 0, 1, 1], [], []>} : vector<3x3xf32>, vector<3x512xf32>, vector<3x512xf32> -> vector<3x512xf32>
    %105 = arith.addf %95, %104 : vector<3x512xf32>
    %c496_i32 = arith.constant 496 : i32
    %106 = tpu.dynamic_rotate %4 by %c496_i32 dim 1 : vector<3x512xf32>, i32 -> vector<3x512xf32>
    %cst_45 = arith.constant 0.000000e+00 : f32
    %107 = vector.shape_cast %41 : vector<1x512xi1> to vector<1x512xi1>
    %108 = vector.broadcast %107 : vector<1x512xi1> to vector<3x512xi1>
    %109 = vector.broadcast %cst_45 : f32 to vector<3x512xf32>
    %110 = arith.select %108, %106, %109 : vector<3x512xi1>, vector<3x512xf32>
    %c7 = arith.constant 7 : index
    %c0_46 = arith.constant 0 : index
    %c0_47 = arith.constant 0 : index
    %111 = vector.load %arg2[%c7, %c0_46, %c0_47] : memref<9x3x3xf32, #tpu.memory_space<vmem>>, vector<1x3x3xf32>
    %112 = vector.shape_cast %111 : vector<1x3x3xf32> to vector<3x3xf32>
    %cst_48 = arith.constant dense<0.000000e+00> : vector<3x512xf32>
    %113 = tpu.matmul %112, %110, %cst_48 {dimension_numbers = #tpu.dot_dimension_numbers<[1], [0], [0], [1], [0, 0, 1, 1], [], []>} : vector<3x3xf32>, vector<3x512xf32>, vector<3x512xf32> -> vector<3x512xf32>
    %114 = arith.addf %105, %113 : vector<3x512xf32>
    %c495_i32 = arith.constant 495 : i32
    %115 = tpu.dynamic_rotate %4 by %c495_i32 dim 1 : vector<3x512xf32>, i32 -> vector<3x512xf32>
    %116 = arith.andi %41, %45 : vector<1x512xi1>
    %cst_49 = arith.constant 0.000000e+00 : f32
    %117 = vector.shape_cast %116 : vector<1x512xi1> to vector<1x512xi1>
    %118 = vector.broadcast %117 : vector<1x512xi1> to vector<3x512xi1>
    %119 = vector.broadcast %cst_49 : f32 to vector<3x512xf32>
    %120 = arith.select %118, %115, %119 : vector<3x512xi1>, vector<3x512xf32>
    %c8 = arith.constant 8 : index
    %c0_50 = arith.constant 0 : index
    %c0_51 = arith.constant 0 : index
    %121 = vector.load %arg2[%c8, %c0_50, %c0_51] : memref<9x3x3xf32, #tpu.memory_space<vmem>>, vector<1x3x3xf32>
    %122 = vector.shape_cast %121 : vector<1x3x3xf32> to vector<3x3xf32>
    %cst_52 = arith.constant dense<0.000000e+00> : vector<3x512xf32>
    %123 = tpu.matmul %122, %120, %cst_52 {dimension_numbers = #tpu.dot_dimension_numbers<[1], [0], [0], [1], [0, 0, 1, 1], [], []>} : vector<3x3xf32>, vector<3x512xf32>, vector<3x512xf32> -> vector<3x512xf32>
    %124 = arith.addf %114, %123 : vector<3x512xf32>
    %c0_53 = arith.constant 0 : index
    %c0_54 = arith.constant 0 : index
    %125 = vector.load %arg3[%c0_53, %c0_54] : memref<3x1xf32, #tpu.memory_space<vmem>>, vector<3x1xf32>
    %126 = vector.broadcast %125 : vector<3x1xf32> to vector<3x512xf32>
    %127 = arith.addf %124, %126 : vector<3x512xf32>
    %128 = vector.extract_strided_slice %127 {offsets = [0, 0], sizes = [3, 256], strides = [1, 1]} : vector<3x512xf32> to vector<3x256xf32>
    %c0_55 = arith.constant 0 : index
    %c0_56 = arith.constant 0 : index
    %c0_57 = arith.constant 0 : index
    %129 = vector.load %arg4[%c0_55, %c0_56, %c0_57] : memref<2x3x256xf32, #tpu.memory_space<vmem>>, vector<1x3x256xf32>
    %130 = vector.shape_cast %129 : vector<1x3x256xf32> to vector<3x256xf32>
    %131 = vector.shape_cast %128 : vector<3x256xf32> to vector<1x3x256xf32>
    tpu.vector_store %arg4[%c0_55, %c0_56, %c0_57], %131 {strides = array<i32>} : memref<2x3x256xf32, #tpu.memory_space<vmem>>, vector<1x3x256xf32>,
    %132 = vector.extract_strided_slice %127 {offsets = [0, 256], sizes = [3, 256], strides = [1, 1]} : vector<3x512xf32> to vector<3x256xf32>
    %c1_58 = arith.constant 1 : index
    %c0_59 = arith.constant 0 : index
    %c0_60 = arith.constant 0 : index
    %133 = vector.load %arg4[%c1_58, %c0_59, %c0_60] : memref<2x3x256xf32, #tpu.memory_space<vmem>>, vector<1x3x256xf32>
    %134 = vector.shape_cast %133 : vector<1x3x256xf32> to vector<3x256xf32>
    %135 = vector.shape_cast %132 : vector<3x256xf32> to vector<1x3x256xf32>
    tpu.vector_store %arg4[%c1_58, %c0_59, %c0_60], %135 {strides = array<i32>} : memref<2x3x256xf32, #tpu.memory_space<vmem>>, vector<1x3x256xf32>,
    return
  }
  func.func @transform_0(%arg0: i32) -> (i32, i32, i32) {
    %c0_i32 = arith.constant 0 : i32
    %c0_i32_0 = arith.constant 0 : i32
    %c0_i32_1 = arith.constant 0 : i32
    return %arg0, %c0_i32, %c0_i32_0 : i32, i32, i32
  }
  func.func @transform_1(%arg0: i32) -> (i32, i32, i32) {
    %c0_i32 = arith.constant 0 : i32
    %c0_i32_0 = arith.constant 0 : i32
    %c0_i32_1 = arith.constant 0 : i32
    %c0_i32_2 = arith.constant 0 : i32
    return %c0_i32, %c0_i32_0, %c0_i32_1 : i32, i32, i32
  }
  func.func @transform_2(%arg0: i32) -> (i32, i32) {
    %c0_i32 = arith.constant 0 : i32
    %c0_i32_0 = arith.constant 0 : i32
    %c0_i32_1 = arith.constant 0 : i32
    return %c0_i32, %c0_i32_0 : i32, i32
  }
  func.func @transform_3(%arg0: i32) -> (i32, i32, i32) {
    %c0_i32 = arith.constant 0 : i32
    %c0_i32_0 = arith.constant 0 : i32
    %c0_i32_1 = arith.constant 0 : i32
    return %arg0, %c0_i32, %c0_i32_0 : i32, i32, i32
  }
}

</mosaic_0001>

<llo_original>
// kernel: tpu_custom_call.1
$region0: #{tpu_custom_call.1}
  #allocation0 [shape = 'u32[]', space=smem, size = 0x4, offset = 0x4, fixed_abs, tag = 'smem constant byte address 0x4 - core index']
  #allocation1 [shape = 'u32[144,128]{1,0:T(1,128)}', space=vmem, size = 0x12000, scoped, tag = 'internal scratch']
  %s0 = inlined_call_operand.vmem [shape: f32[2,3,256], index: 0, kind: input, shape index: {}]
  %s1 = inlined_call_operand.vmem [shape: f32[9,3,3], index: 1, kind: input, shape index: {}]
  %s2 = inlined_call_operand.vmem [shape: f32[3,1], index: 2, kind: input, shape index: {}]
  %s3 = inlined_call_operand.vmem [shape: f32[2,3,256], index: 3, kind: output, shape index: {}]
  %s4 = sld [smem:[#allocation0]]
  $region22: #{tpu_custom_call.1} parent=0
    _
  %s6 = ssub.s32 1, %s4
  %s7 = scalar_select 0, %s6, %s4
  // Predicated region
  $region2: #{tpu_custom_call.1} parent=0 // pred_check
    _
  $region3: #{tpu_custom_call.1} parent=0 // pred_check_branch
    %9 = sbr.rel (0) target = $region5
  $region4: #{tpu_custom_call.1} parent=0 // pred_region
    _
  $region5: #{tpu_custom_call.1} parent=0 // pred_fallthru
    _
  // Predicated region
  $region6: #{tpu_custom_call.1} parent=0 // pred_check
    _
  $region7: #{tpu_custom_call.1} parent=0 // pred_check_branch
    %11 = sbr.rel (0) target = $region9
  $region8: #{tpu_custom_call.1} parent=0 // pred_region
    _
  $region9: #{tpu_custom_call.1} parent=0 // pred_fallthru
    _
  // Predicated region
  $region10: #{tpu_custom_call.1} parent=0 // pred_check
    _
  $region11: #{tpu_custom_call.1} parent=0 // pred_check_branch
    %13 = sbr.rel (0) target = $region13
  $region12: #{tpu_custom_call.1} parent=0 // pred_region
    _
  $region13: #{tpu_custom_call.1} parent=0 // pred_fallthru
    _
  %v14 = vld [vmem:[%s0] sm:$0x77]
  %s15 = scalar_lea.vmem %s0, 8
  %v16 = vld [vmem:[%s15] sm:$0x77]
  %v18 = vcombine.high %v14, %v14
  %v21 = vcombine.high %v16, %v16
  %v23 = vlaneseq
  %v24 = vand.u32 %v23, 127
  %v25 = vadd.s32 %v24, 128
  %v26 = vadd.s32 %v24, 256
  %v27 = vadd.s32 %v24, 384
  %vm28 = vcmp.lt.s32.totalorder %v24, 0
  %v29 = vsub.s32 0, %v24
  %v30 = vsel %vm28, %v29, %v24
  %v31 = vshrl.u32 %v30, 8
  %v32 = vand.u32 %v30, 255
  %v33 = vsub.s32 0, %v32
  %v34 = vsel %vm28, %v33, %v32
  %vm35 = vcmp.lt.s32.totalorder %v25, 0
  %v36 = vsub.s32 0, %v25
  %v37 = vsel %vm35, %v36, %v25
  %v38 = vshrl.u32 %v37, 8
  %v39 = vand.u32 %v37, 255
  %v40 = vsub.s32 0, %v39
  %v41 = vsel %vm35, %v40, %v39
  %vm42 = vcmp.lt.s32.totalorder %v26, 0
  %v43 = vsub.s32 0, %v26
  %v44 = vsel %vm42, %v43, %v26
  %v45 = vshrl.u32 %v44, 8
  %v46 = vand.u32 %v44, 255
  %v47 = vsub.s32 0, %v46
  %v48 = vsel %vm42, %v47, %v46
  %vm49 = vcmp.lt.s32.totalorder %v27, 0
  %v50 = vsub.s32 0, %v27
  %v51 = vsel %vm49, %v50, %v27
  %v52 = vshrl.u32 %v51, 8
  %v53 = vand.u32 %v51, 255
  %v54 = vsub.s32 0, %v53
  %v55 = vsel %vm49, %v54, %v53
  %vm56 = vcmp.ne.s32.totalorder %v34, 0
  %vm57 = vcmp.ne.s32.totalorder %v41, 0
  %vm58 = vcmp.ne.s32.totalorder %v48, 0
  %vm59 = vcmp.ne.s32.totalorder %v55, 0
  %vm60 = vcmp.lt.s32.totalorder %v34, 0
  %vm61 = vcmp.lt.s32.totalorder %v41, 0
  %vm62 = vcmp.lt.s32.totalorder %v48, 0
  %vm63 = vcmp.lt.s32.totalorder %v55, 0
  %vm64 = vmand %vm60, %vm56
  %vm65 = vmand %vm61, %vm57
  %vm66 = vmand %vm62, %vm58
  %vm67 = vmand %vm63, %vm59
  %v68 = vadd.s32 %v34, 256
  %v69 = vadd.s32 %v41, 256
  %v70 = vadd.s32 %v48, 256
  %v71 = vadd.s32 %v55, 256
  %v72 = vsel %vm64, %v68, %v34
  %v73 = vsel %vm65, %v69, %v41
  %v74 = vsel %vm66, %v70, %v48
  %v75 = vsel %vm67, %v71, %v55
  %vm76 = vcmp.lt.s32.totalorder %v24, 0
  %v77 = vsub.s32 0, %v24
  %v78 = vsel %vm76, %v77, %v24
  %v79 = vshrl.u32 %v78, 4
  %v80 = vand.u32 %v78, 15
  %v81 = vsub.s32 0, %v80
  %v82 = vsel %vm76, %v81, %v80
  %vm83 = vcmp.lt.s32.totalorder %v25, 0
  %v84 = vsub.s32 0, %v25
  %v85 = vsel %vm83, %v84, %v25
  %v86 = vshrl.u32 %v85, 4
  %v87 = vand.u32 %v85, 15
  %v88 = vsub.s32 0, %v87
  %v89 = vsel %vm83, %v88, %v87
  %vm90 = vcmp.lt.s32.totalorder %v26, 0
  %v91 = vsub.s32 0, %v26
  %v92 = vsel %vm90, %v91, %v26
  %v93 = vshrl.u32 %v92, 4
  %v94 = vand.u32 %v92, 15
  %v95 = vsub.s32 0, %v94
  %v96 = vsel %vm90, %v95, %v94
  %vm97 = vcmp.lt.s32.totalorder %v27, 0
  %v98 = vsub.s32 0, %v27
  %v99 = vsel %vm97, %v98, %v27
  %v100 = vshrl.u32 %v99, 4
  %v101 = vand.u32 %v99, 15
  %v102 = vsub.s32 0, %v101
  %v103 = vsel %vm97, %v102, %v101
  %vm104 = vcmp.ne.s32.totalorder %v82, 0
  %vm105 = vcmp.ne.s32.totalorder %v89, 0
  %vm106 = vcmp.ne.s32.totalorder %v96, 0
  %vm107 = vcmp.ne.s32.totalorder %v103, 0
  %vm108 = vcmp.lt.s32.totalorder %v82, 0
  %vm109 = vcmp.lt.s32.totalorder %v89, 0
  %vm110 = vcmp.lt.s32.totalorder %v96, 0
  %vm111 = vcmp.lt.s32.totalorder %v103, 0
  %vm112 = vmand %vm108, %vm104
  %vm113 = vmand %vm109, %vm105
  %vm114 = vmand %vm110, %vm106
  %vm115 = vmand %vm111, %vm107
  %v116 = vadd.s32 %v82, 16
  %v117 = vadd.s32 %v89, 16
  %v118 = vadd.s32 %v96, 16
  %v119 = vadd.s32 %v103, 16
  %v120 = vsel %vm112, %v116, %v82
  %v121 = vsel %vm113, %v117, %v89
  %v122 = vsel %vm114, %v118, %v96
  %v123 = vsel %vm115, %v119, %v103
  %vm124 = vcmp.ge.s32.totalorder %v72, 16
  %vm125 = vcmp.ge.s32.totalorder %v73, 16
  %vm126 = vcmp.ge.s32.totalorder %v74, 16
  %vm127 = vcmp.ge.s32.totalorder %v75, 16
  %vm128 = vcmp.lt.s32.totalorder %v72, 240
  %vm129 = vcmp.lt.s32.totalorder %v73, 240
  %vm130 = vcmp.lt.s32.totalorder %v74, 240
  %vm131 = vcmp.lt.s32.totalorder %v75, 240
  %vm132 = vcmp.ge.s32.totalorder %v120, 1
  %vm133 = vcmp.ge.s32.totalorder %v121, 1
  %vm134 = vcmp.ge.s32.totalorder %v122, 1
  %vm135 = vcmp.ge.s32.totalorder %v123, 1
  %vm136 = vcmp.lt.s32.totalorder %v120, 15
  %vm137 = vcmp.lt.s32.totalorder %v121, 15
  %vm138 = vcmp.lt.s32.totalorder %v122, 15
  %vm139 = vcmp.lt.s32.totalorder %v123, 15
  %140 = vrot.lane.b32.xlu0 %v14, 17
  %v141 = vpop.permute.xlu0 %140
  %142 = vrot.lane.b32.xlu0 %v18, 17
  %v143 = vpop.permute.xlu0 %142
  %144 = vrot.lane.b32.xlu0 %v16, 17
  %v145 = vpop.permute.xlu0 %144
  %146 = vrot.lane.b32.xlu0 %v21, 17
  %v147 = vpop.permute.xlu0 %146
  %vm148 = vcmp.lt.s32.totalorder %v24, 17
  %v149 = vsel %vm148, %v145, %v147
  %v150 = vsel %vm148, %v143, %v145
  %v151 = vsel %vm148, %v141, %v143
  %v152 = vsel %vm148, %v147, %v141
  %vm153 = vmand %vm124, %vm132
  %vm154 = vmand %vm125, %vm133
  %vm155 = vmand %vm126, %vm134
  %vm156 = vmand %vm127, %vm135
  %v157 = vsel %vm153, 1, 0
  %v158 = vsel %vm154, 1, 0
  %v159 = vsel %vm155, 1, 0
  %v160 = vsel %vm156, 1, 0
  %vm161 = vcmp.eq.s32.totalorder %v157, 1
  %vm162 = vcmp.eq.s32.totalorder %v158, 1
  %vm163 = vcmp.eq.s32.totalorder %v159, 1
  %vm164 = vcmp.eq.s32.totalorder %v160, 1
  %v165 = vsel %vm161, %v152, 0.0
  %v166 = vsel %vm162, %v151, 0.0
  %v167 = vsel %vm163, %v150, 0.0
  %v168 = vsel %vm164, %v149, 0.0
  %v169 = vld [vmem:[%s1] sm:$0x7]
  %170 = vrot.lane.b32.xlu0 %v14, 16
  %v171 = vpop.permute.xlu0 %170
  %172 = vrot.lane.b32.xlu0 %v18, 16
  %v173 = vpop.permute.xlu0 %172
  %174 = vrot.lane.b32.xlu0 %v16, 16
  %v175 = vpop.permute.xlu0 %174
  %176 = vrot.lane.b32.xlu0 %v21, 16
  %v177 = vpop.permute.xlu0 %176
  %vm178 = vcmp.lt.s32.totalorder %v24, 16
  %v179 = vsel %vm178, %v175, %v177
  %v180 = vsel %vm178, %v173, %v175
  %v181 = vsel %vm178, %v171, %v173
  %v182 = vsel %vm178, %v177, %v171
  %v183 = vsel %vm124, 1, 0
  %v184 = vsel %vm125, 1, 0
  %v185 = vsel %vm126, 1, 0
  %v186 = vsel %vm127, 1, 0
  %vm187 = vcmp.eq.s32.totalorder %v183, 1
  %vm188 = vcmp.eq.s32.totalorder %v184, 1
  %vm189 = vcmp.eq.s32.totalorder %v185, 1
  %vm190 = vcmp.eq.s32.totalorder %v186, 1
  %v191 = vsel %vm187, %v182, 0.0
  %v192 = vsel %vm188, %v181, 0.0
  %v193 = vsel %vm189, %v180, 0.0
  %v194 = vsel %vm190, %v179, 0.0
  %s195 = scalar_lea.vmem %s1, 4
  %v196 = vld [vmem:[%s195] sm:$0x7]
  %vm197 = vcmask 23552
  %v199 = vsel %vm197, %v196, 0
  %vm201 = vcmask 1042432
  %v203 = vsel %vm201, %v191, 0
  %v206 = vsel %vm201, %v192, 0
  %v209 = vsel %vm201, %v193, 0
  %v212 = vsel %vm201, %v194, 0
  %214 = vmatprep.subr.mxu0 0.0
  %215 = vmatpush1.msra.mxu0 0.0
  %216 = vmatprep.subr.mxu0 0.0
  %217 = vmatpush1.msra.mxu0 0.0
  %218 = vmatprep.subr.mxu0 0.0
  %219 = vmatpush1.msra.mxu0 0.0
  %220 = vmatprep.subr.mxu0 0.0
  %221 = vmatpush1.msra.mxu0 0.0
  %222 = vmatprep.subr.mxu0 0.0
  %223 = vmatpush1.msra.mxu0 0.0
  %224 = vmatprep.subr.mxu0 0.0
  %225 = vmatpush1.msra.mxu0 0.0
  %226 = vmatprep.subr.mxu0 0.0
  %227 = vmatpush1.msra.mxu0 0.0
  %228 = vmatprep.subr.mxu0 0.0
  %229 = vmatpush1.msra.mxu0 0.0
  %230 = vmatprep.subr.mxu0 0.0
  %231 = vmatpush1.msra.mxu0 0.0
  %232 = vmatprep.subr.mxu0 0.0
  %233 = vmatpush1.msra.mxu0 0.0
  %234 = vmatprep.subr.mxu0 0.0
  %235 = vmatpush1.msra.mxu0 0.0
  %236 = vmatprep.subr.mxu0 0.0
  %237 = vmatpush1.msra.mxu0 0.0
  %238 = vmatprep.subr.mxu0 0.0
  %239 = vmatpush1.msra.mxu0 0.0
  %240 = vmatprep.subr.mxu0 0.0
  %241 = vmatpush1.msra.mxu0 0.0
  %242 = vmatprep.subr.mxu0 0.0
  %243 = vmatpush1.msra.mxu0 0.0
  %244 = vmatprep.subr.mxu0 %v206
  %245 = vmatpush1.msra.mxu0 %v203
  %246 = vmatprep.subr.mxu0 0.0
  %247 = vmatpush2.msra.mxu0 0.0
  %248 = vmatprep.subr.mxu0 0.0
  %249 = vmatpush2.msra.mxu0 0.0
  %250 = vmatprep.subr.mxu0 0.0
  %251 = vmatpush2.msra.mxu0 0.0
  %252 = vmatprep.subr.mxu0 0.0
  %253 = vmatpush2.msra.mxu0 0.0
  %254 = vmatprep.subr.mxu0 0.0
  %255 = vmatpush2.msra.mxu0 0.0
  %256 = vmatprep.subr.mxu0 0.0
  %257 = vmatpush2.msra.mxu0 0.0
  %258 = vmatprep.subr.mxu0 0.0
  %259 = vmatpush2.msra.mxu0 0.0
  %260 = vmatprep.subr.mxu0 0.0
  %261 = vmatpush2.msra.mxu0 0.0
  %262 = vmatprep.subr.mxu0 0.0
  %263 = vmatpush2.msra.mxu0 0.0
  %264 = vmatprep.subr.mxu0 0.0
  %265 = vmatpush2.msra.mxu0 0.0
  %266 = vmatprep.subr.mxu0 0.0
  %267 = vmatpush2.msra.mxu0 0.0
  %268 = vmatprep.subr.mxu0 0.0
  %269 = vmatpush2.msra.mxu0 0.0
  %270 = vmatprep.subr.mxu0 0.0
  %271 = vmatpush2.msra.mxu0 0.0
  %272 = vmatprep.subr.mxu0 0.0
  %273 = vmatpush2.msra.mxu0 0.0
  %274 = vmatprep.subr.mxu0 0.0
  %275 = vmatpush2.msra.mxu0 0.0
  %276 = vmatprep.subr.mxu0 0.0
  %277 = vmatpush2.msra.mxu0 0.0
  %278 = vmatprep.mubr.f32.mxu0 0.0
  %279 = vmatmul.mubr.f32.gmra.mxu0 %v199
  %v280 = vpop.f32.mrf.mxu0
  %v281 = vadd.f32 0.0, %v280
  %v282 = vpop.f32.mrf.mxu0
  %v283 = vadd.f32 0.0, %v282
  %284 = vdwg.mxu0
  %285 = vmatprep.subr.mxu0 0.0
  %286 = vmatpush1.msra.mxu0 0.0
  %287 = vmatprep.subr.mxu0 0.0
  %288 = vmatpush1.msra.mxu0 0.0
  %289 = vmatprep.subr.mxu0 0.0
  %290 = vmatpush1.msra.mxu0 0.0
  %291 = vmatprep.subr.mxu0 0.0
  %292 = vmatpush1.msra.mxu0 0.0
  %293 = vmatprep.subr.mxu0 0.0
  %294 = vmatpush1.msra.mxu0 0.0
  %295 = vmatprep.subr.mxu0 0.0
  %296 = vmatpush1.msra.mxu0 0.0
  %297 = vmatprep.subr.mxu0 0.0
  %298 = vmatpush1.msra.mxu0 0.0
  %299 = vmatprep.subr.mxu0 0.0
  %300 = vmatpush1.msra.mxu0 0.0
  %301 = vmatprep.subr.mxu0 0.0
  %302 = vmatpush1.msra.mxu0 0.0
  %303 = vmatprep.subr.mxu0 0.0
  %304 = vmatpush1.msra.mxu0 0.0
  %305 = vmatprep.subr.mxu0 0.0
  %306 = vmatpush1.msra.mxu0 0.0
  %307 = vmatprep.subr.mxu0 0.0
  %308 = vmatpush1.msra.mxu0 0.0
  %309 = vmatprep.subr.mxu0 0.0
  %310 = vmatpush1.msra.mxu0 0.0
  %311 = vmatprep.subr.mxu0 0.0
  %312 = vmatpush1.msra.mxu0 0.0
  %313 = vmatprep.subr.mxu0 0.0
  %314 = vmatpush1.msra.mxu0 0.0
  %315 = vmatprep.subr.mxu0 %v212
  %316 = vmatpush1.msra.mxu0 %v209
  %317 = vmatprep.subr.mxu0 0.0
  %318 = vmatpush2.msra.mxu0 0.0
  %319 = vmatprep.subr.mxu0 0.0
  %320 = vmatpush2.msra.mxu0 0.0
  %321 = vmatprep.subr.mxu0 0.0
  %322 = vmatpush2.msra.mxu0 0.0
  %323 = vmatprep.subr.mxu0 0.0
  %324 = vmatpush2.msra.mxu0 0.0
  %325 = vmatprep.subr.mxu0 0.0
  %326 = vmatpush2.msra.mxu0 0.0
  %327 = vmatprep.subr.mxu0 0.0
  %328 = vmatpush2.msra.mxu0 0.0
  %329 = vmatprep.subr.mxu0 0.0
  %330 = vmatpush2.msra.mxu0 0.0
  %331 = vmatprep.subr.mxu0 0.0
  %332 = vmatpush2.msra.mxu0 0.0
  %333 = vmatprep.subr.mxu0 0.0
  %334 = vmatpush2.msra.mxu0 0.0
  %335 = vmatprep.subr.mxu0 0.0
  %336 = vmatpush2.msra.mxu0 0.0
  %337 = vmatprep.subr.mxu0 0.0
  %338 = vmatpush2.msra.mxu0 0.0
  %339 = vmatprep.subr.mxu0 0.0
  %340 = vmatpush2.msra.mxu0 0.0
  %341 = vmatprep.subr.mxu0 0.0
  %342 = vmatpush2.msra.mxu0 0.0
  %343 = vmatprep.subr.mxu0 0.0
  %344 = vmatpush2.msra.mxu0 0.0
  %345 = vmatprep.subr.mxu0 0.0
  %346 = vmatpush2.msra.mxu0 0.0
  %347 = vmatprep.subr.mxu0 0.0
  %348 = vmatpush2.msra.mxu0 0.0
  %349 = vmatprep.mubr.f32.mxu0 0.0
  %350 = vmatmul.mubr.f32.gmra.mxu0 %v199
  %v351 = vpop.f32.mrf.mxu0
  %v352 = vadd.f32 0.0, %v351
  %v353 = vpop.f32.mrf.mxu0
  %v354 = vadd.f32 0.0, %v353
  %355 = vdwg.mxu0
  %v357 = vsel %vm197, %v169, 0
  %v360 = vsel %vm201, %v165, 0
  %v363 = vsel %vm201, %v166, 0
  %v366 = vsel %vm201, %v167, 0
  %v369 = vsel %vm201, %v168, 0
  %371 = vmatprep.subr.mxu0 0.0
  %372 = vmatpush1.msra.mxu0 0.0
  %373 = vmatprep.subr.mxu0 0.0
  %374 = vmatpush1.msra.mxu0 0.0
  %375 = vmatprep.subr.mxu0 0.0
  %376 = vmatpush1.msra.mxu0 0.0
  %377 = vmatprep.subr.mxu0 0.0
  %378 = vmatpush1.msra.mxu0 0.0
  %379 = vmatprep.subr.mxu0 0.0
  %380 = vmatpush1.msra.mxu0 0.0
  %381 = vmatprep.subr.mxu0 0.0
  %382 = vmatpush1.msra.mxu0 0.0
  %383 = vmatprep.subr.mxu0 0.0
  %384 = vmatpush1.msra.mxu0 0.0
  %385 = vmatprep.subr.mxu0 0.0
  %386 = vmatpush1.msra.mxu0 0.0
  %387 = vmatprep.subr.mxu0 0.0
  %388 = vmatpush1.msra.mxu0 0.0
  %389 = vmatprep.subr.mxu0 0.0
  %390 = vmatpush1.msra.mxu0 0.0
  %391 = vmatprep.subr.mxu0 0.0
  %392 = vmatpush1.msra.mxu0 0.0
  %393 = vmatprep.subr.mxu0 0.0
  %394 = vmatpush1.msra.mxu0 0.0
  %395 = vmatprep.subr.mxu0 0.0
  %396 = vmatpush1.msra.mxu0 0.0
  %397 = vmatprep.subr.mxu0 0.0
  %398 = vmatpush1.msra.mxu0 0.0
  %399 = vmatprep.subr.mxu0 0.0
  %400 = vmatpush1.msra.mxu0 0.0
  %401 = vmatprep.subr.mxu0 %v363
  %402 = vmatpush1.msra.mxu0 %v360
  %403 = vmatprep.subr.mxu0 0.0
  %404 = vmatpush2.msra.mxu0 0.0
  %405 = vmatprep.subr.mxu0 0.0
  %406 = vmatpush2.msra.mxu0 0.0
  %407 = vmatprep.subr.mxu0 0.0
  %408 = vmatpush2.msra.mxu0 0.0
  %409 = vmatprep.subr.mxu0 0.0
  %410 = vmatpush2.msra.mxu0 0.0
  %411 = vmatprep.subr.mxu0 0.0
  %412 = vmatpush2.msra.mxu0 0.0
  %413 = vmatprep.subr.mxu0 0.0
  %414 = vmatpush2.msra.mxu0 0.0
  %415 = vmatprep.subr.mxu0 0.0
  %416 = vmatpush2.msra.mxu0 0.0
  %417 = vmatprep.subr.mxu0 0.0
  %418 = vmatpush2.msra.mxu0 0.0
  %419 = vmatprep.subr.mxu0 0.0
  %420 = vmatpush2.msra.mxu0 0.0
  %421 = vmatprep.subr.mxu0 0.0
  %422 = vmatpush2.msra.mxu0 0.0
  %423 = vmatprep.subr.mxu0 0.0
  %424 = vmatpush2.msra.mxu0 0.0
  %425 = vmatprep.subr.mxu0 0.0
  %426 = vmatpush2.msra.mxu0 0.0
  %427 = vmatprep.subr.mxu0 0.0
  %428 = vmatpush2.msra.mxu0 0.0
  %429 = vmatprep.subr.mxu0 0.0
  %430 = vmatpush2.msra.mxu0 0.0
  %431 = vmatprep.subr.mxu0 0.0
  %432 = vmatpush2.msra.mxu0 0.0
  %433 = vmatprep.subr.mxu0 0.0
  %434 = vmatpush2.msra.mxu0 0.0
  %435 = vmatprep.mubr.f32.mxu0 0.0
  %436 = vmatmul.mubr.f32.gmra.mxu0 %v357
  %v437 = vpop.f32.mrf.mxu0
  %v438 = vadd.f32 %v281, %v437
  %v439 = vpop.f32.mrf.mxu0
  %v440 = vadd.f32 %v283, %v439
  %441 = vdwg.mxu0
  %442 = vmatprep.subr.mxu0 0.0
  %443 = vmatpush1.msra.mxu0 0.0
  %444 = vmatprep.subr.mxu0 0.0
  %445 = vmatpush1.msra.mxu0 0.0
  %446 = vmatprep.subr.mxu0 0.0
  %447 = vmatpush1.msra.mxu0 0.0
  %448 = vmatprep.subr.mxu0 0.0
  %449 = vmatpush1.msra.mxu0 0.0
  %450 = vmatprep.subr.mxu0 0.0
  %451 = vmatpush1.msra.mxu0 0.0
  %452 = vmatprep.subr.mxu0 0.0
  %453 = vmatpush1.msra.mxu0 0.0
  %454 = vmatprep.subr.mxu0 0.0
  %455 = vmatpush1.msra.mxu0 0.0
  %456 = vmatprep.subr.mxu0 0.0
  %457 = vmatpush1.msra.mxu0 0.0
  %458 = vmatprep.subr.mxu0 0.0
  %459 = vmatpush1.msra.mxu0 0.0
  %460 = vmatprep.subr.mxu0 0.0
  %461 = vmatpush1.msra.mxu0 0.0
  %462 = vmatprep.subr.mxu0 0.0
  %463 = vmatpush1.msra.mxu0 0.0
  %464 = vmatprep.subr.mxu0 0.0
  %465 = vmatpush1.msra.mxu0 0.0
  %466 = vmatprep.subr.mxu0 0.0
  %467 = vmatpush1.msra.mxu0 0.0
  %468 = vmatprep.subr.mxu0 0.0
  %469 = vmatpush1.msra.mxu0 0.0
  %470 = vmatprep.subr.mxu0 0.0
  %471 = vmatpush1.msra.mxu0 0.0
  %472 = vmatprep.subr.mxu0 %v369
  %473 = vmatpush1.msra.mxu0 %v366
  %474 = vmatprep.subr.mxu0 0.0
  %475 = vmatpush2.msra.mxu0 0.0
  %476 = vmatprep.subr.mxu0 0.0
  %477 = vmatpush2.msra.mxu0 0.0
  %478 = vmatprep.subr.mxu0 0.0
  %479 = vmatpush2.msra.mxu0 0.0
  %480 = vmatprep.subr.mxu0 0.0
  %481 = vmatpush2.msra.mxu0 0.0
  %482 = vmatprep.subr.mxu0 0.0
  %483 = vmatpush2.msra.mxu0 0.0
  %484 = vmatprep.subr.mxu0 0.0
  %485 = vmatpush2.msra.mxu0 0.0
  %486 = vmatprep.subr.mxu0 0.0
  %487 = vmatpush2.msra.mxu0 0.0
  %488 = vmatprep.subr.mxu0 0.0
  %489 = vmatpush2.msra.mxu0 0.0
  %490 = vmatprep.subr.mxu0 0.0
  %491 = vmatpush2.msra.mxu0 0.0
  %492 = vmatprep.subr.mxu0 0.0
  %493 = vmatpush2.msra.mxu0 0.0
  %494 = vmatprep.subr.mxu0 0.0
  %495 = vmatpush2.msra.mxu0 0.0
  %496 = vmatprep.subr.mxu0 0.0
  %497 = vmatpush2.msra.mxu0 0.0
  %498 = vmatprep.subr.mxu0 0.0
  %499 = vmatpush2.msra.mxu0 0.0
  %500 = vmatprep.subr.mxu0 0.0
  %501 = vmatpush2.msra.mxu0 0.0
  %502 = vmatprep.subr.mxu0 0.0
  %503 = vmatpush2.msra.mxu0 0.0
  %504 = vmatprep.subr.mxu0 0.0
  %505 = vmatpush2.msra.mxu0 0.0
  %506 = vmatprep.mubr.f32.mxu0 0.0
  %507 = vmatmul.mubr.f32.gmra.mxu0 %v357
  %v508 = vpop.f32.mrf.mxu0
  %v509 = vadd.f32 %v352, %v508
  %v510 = vpop.f32.mrf.mxu0
  %v511 = vadd.f32 %v354, %v510
  %512 = vdwg.mxu0
  %513 = vrot.lane.b32.xlu0 %v14, 15
  %v514 = vpop.permute.xlu0 %513
  %515 = vrot.lane.b32.xlu0 %v18, 15
  %v516 = vpop.permute.xlu0 %515
  %517 = vrot.lane.b32.xlu0 %v16, 15
  %v518 = vpop.permute.xlu0 %517
  %519 = vrot.lane.b32.xlu0 %v21, 15
  %v520 = vpop.permute.xlu0 %519
  %vm521 = vcmp.lt.s32.totalorder %v24, 15
  %v522 = vsel %vm521, %v518, %v520
  %v523 = vsel %vm521, %v516, %v518
  %v524 = vsel %vm521, %v514, %v516
  %v525 = vsel %vm521, %v520, %v514
  %vm526 = vmand %vm124, %vm136
  %vm527 = vmand %vm125, %vm137
  %vm528 = vmand %vm126, %vm138
  %vm529 = vmand %vm127, %vm139
  %v530 = vsel %vm526, 1, 0
  %v531 = vsel %vm527, 1, 0
  %v532 = vsel %vm528, 1, 0
  %v533 = vsel %vm529, 1, 0
  %vm534 = vcmp.eq.s32.totalorder %v530, 1
  %vm535 = vcmp.eq.s32.totalorder %v531, 1
  %vm536 = vcmp.eq.s32.totalorder %v532, 1
  %vm537 = vcmp.eq.s32.totalorder %v533, 1
  %v538 = vsel %vm534, %v525, 0.0
  %v539 = vsel %vm535, %v524, 0.0
  %v540 = vsel %vm536, %v523, 0.0
  %v541 = vsel %vm537, %v522, 0.0
  %s542 = scalar_lea.vmem %s1, 8
  %v543 = vld [vmem:[%s542] sm:$0x7]
  %v545 = vsel %vm197, %v543, 0
  %v548 = vsel %vm201, %v538, 0
  %v551 = vsel %vm201, %v539, 0
  %v554 = vsel %vm201, %v540, 0
  %v557 = vsel %vm201, %v541, 0
  %559 = vmatprep.subr.mxu0 0.0
  %560 = vmatpush1.msra.mxu0 0.0
  %561 = vmatprep.subr.mxu0 0.0
  %562 = vmatpush1.msra.mxu0 0.0
  %563 = vmatprep.subr.mxu0 0.0
  %564 = vmatpush1.msra.mxu0 0.0
  %565 = vmatprep.subr.mxu0 0.0
  %566 = vmatpush1.msra.mxu0 0.0
  %567 = vmatprep.subr.mxu0 0.0
  %568 = vmatpush1.msra.mxu0 0.0
  %569 = vmatprep.subr.mxu0 0.0
  %570 = vmatpush1.msra.mxu0 0.0
  %571 = vmatprep.subr.mxu0 0.0
  %572 = vmatpush1.msra.mxu0 0.0
  %573 = vmatprep.subr.mxu0 0.0
  %574 = vmatpush1.msra.mxu0 0.0
  %575 = vmatprep.subr.mxu0 0.0
  %576 = vmatpush1.msra.mxu0 0.0
  %577 = vmatprep.subr.mxu0 0.0
  %578 = vmatpush1.msra.mxu0 0.0
  %579 = vmatprep.subr.mxu0 0.0
  %580 = vmatpush1.msra.mxu0 0.0
  %581 = vmatprep.subr.mxu0 0.0
  %582 = vmatpush1.msra.mxu0 0.0
  %583 = vmatprep.subr.mxu0 0.0
  %584 = vmatpush1.msra.mxu0 0.0
  %585 = vmatprep.subr.mxu0 0.0
  %586 = vmatpush1.msra.mxu0 0.0
  %587 = vmatprep.subr.mxu0 0.0
  %588 = vmatpush1.msra.mxu0 0.0
  %589 = vmatprep.subr.mxu0 %v551
  %590 = vmatpush1.msra.mxu0 %v548
  %591 = vmatprep.subr.mxu0 0.0
  %592 = vmatpush2.msra.mxu0 0.0
  %593 = vmatprep.subr.mxu0 0.0
  %594 = vmatpush2.msra.mxu0 0.0
  %595 = vmatprep.subr.mxu0 0.0
  %596 = vmatpush2.msra.mxu0 0.0
  %597 = vmatprep.subr.mxu0 0.0
  %598 = vmatpush2.msra.mxu0 0.0
  %599 = vmatprep.subr.mxu0 0.0
  %600 = vmatpush2.msra.mxu0 0.0
  %601 = vmatprep.subr.mxu0 0.0
  %602 = vmatpush2.msra.mxu0 0.0
  %603 = vmatprep.subr.mxu0 0.0
  %604 = vmatpush2.msra.mxu0 0.0
  %605 = vmatprep.subr.mxu0 0.0
  %606 = vmatpush2.msra.mxu0 0.0
  %607 = vmatprep.subr.mxu0 0.0
  %608 = vmatpush2.msra.mxu0 0.0
  %609 = vmatprep.subr.mxu0 0.0
  %610 = vmatpush2.msra.mxu0 0.0
  %611 = vmatprep.subr.mxu0 0.0
  %612 = vmatpush2.msra.mxu0 0.0
  %613 = vmatprep.subr.mxu0 0.0
  %614 = vmatpush2.msra.mxu0 0.0
  %615 = vmatprep.subr.mxu0 0.0
  %616 = vmatpush2.msra.mxu0 0.0
  %617 = vmatprep.subr.mxu0 0.0
  %618 = vmatpush2.msra.mxu0 0.0
  %619 = vmatprep.subr.mxu0 0.0
  %620 = vmatpush2.msra.mxu0 0.0
  %621 = vmatprep.subr.mxu0 0.0
  %622 = vmatpush2.msra.mxu0 0.0
  %623 = vmatprep.mubr.f32.mxu0 0.0
  %624 = vmatmul.mubr.f32.gmra.mxu0 %v545
  %v625 = vpop.f32.mrf.mxu0
  %v626 = vadd.f32 0.0, %v625
  %v627 = vpop.f32.mrf.mxu0
  %v628 = vadd.f32 0.0, %v627
  %629 = vdwg.mxu0
  %630 = vmatprep.subr.mxu0 0.0
  %631 = vmatpush1.msra.mxu0 0.0
  %632 = vmatprep.subr.mxu0 0.0
  %633 = vmatpush1.msra.mxu0 0.0
  %634 = vmatprep.subr.mxu0 0.0
  %635 = vmatpush1.msra.mxu0 0.0
  %636 = vmatprep.subr.mxu0 0.0
  %637 = vmatpush1.msra.mxu0 0.0
  %638 = vmatprep.subr.mxu0 0.0
  %639 = vmatpush1.msra.mxu0 0.0
  %640 = vmatprep.subr.mxu0 0.0
  %641 = vmatpush1.msra.mxu0 0.0
  %642 = vmatprep.subr.mxu0 0.0
  %643 = vmatpush1.msra.mxu0 0.0
  %644 = vmatprep.subr.mxu0 0.0
  %645 = vmatpush1.msra.mxu0 0.0
  %646 = vmatprep.subr.mxu0 0.0
  %647 = vmatpush1.msra.mxu0 0.0
  %648 = vmatprep.subr.mxu0 0.0
  %649 = vmatpush1.msra.mxu0 0.0
  %650 = vmatprep.subr.mxu0 0.0
  %651 = vmatpush1.msra.mxu0 0.0
  %652 = vmatprep.subr.mxu0 0.0
  %653 = vmatpush1.msra.mxu0 0.0
  %654 = vmatprep.subr.mxu0 0.0
  %655 = vmatpush1.msra.mxu0 0.0
  %656 = vmatprep.subr.mxu0 0.0
  %657 = vmatpush1.msra.mxu0 0.0
  %658 = vmatprep.subr.mxu0 0.0
  %659 = vmatpush1.msra.mxu0 0.0
  %660 = vmatprep.subr.mxu0 %v557
  %661 = vmatpush1.msra.mxu0 %v554
  %662 = vmatprep.subr.mxu0 0.0
  %663 = vmatpush2.msra.mxu0 0.0
  %664 = vmatprep.subr.mxu0 0.0
  %665 = vmatpush2.msra.mxu0 0.0
  %666 = vmatprep.subr.mxu0 0.0
  %667 = vmatpush2.msra.mxu0 0.0
  %668 = vmatprep.subr.mxu0 0.0
  %669 = vmatpush2.msra.mxu0 0.0
  %670 = vmatprep.subr.mxu0 0.0
  %671 = vmatpush2.msra.mxu0 0.0
  %672 = vmatprep.subr.mxu0 0.0
  %673 = vmatpush2.msra.mxu0 0.0
  %674 = vmatprep.subr.mxu0 0.0
  %675 = vmatpush2.msra.mxu0 0.0
  %676 = vmatprep.subr.mxu0 0.0
  %677 = vmatpush2.msra.mxu0 0.0
  %678 = vmatprep.subr.mxu0 0.0
  %679 = vmatpush2.msra.mxu0 0.0
  %680 = vmatprep.subr.mxu0 0.0
  %681 = vmatpush2.msra.mxu0 0.0
  %682 = vmatprep.subr.mxu0 0.0
  %683 = vmatpush2.msra.mxu0 0.0
  %684 = vmatprep.subr.mxu0 0.0
  %685 = vmatpush2.msra.mxu0 0.0
  %686 = vmatprep.subr.mxu0 0.0
  %687 = vmatpush2.msra.mxu0 0.0
  %688 = vmatprep.subr.mxu0 0.0
  %689 = vmatpush2.msra.mxu0 0.0
  %690 = vmatprep.subr.mxu0 0.0
  %691 = vmatpush2.msra.mxu0 0.0
  %692 = vmatprep.subr.mxu0 0.0
  %693 = vmatpush2.msra.mxu0 0.0
  %694 = vmatprep.mubr.f32.mxu0 0.0
  %695 = vmatmul.mubr.f32.gmra.mxu0 %v545
  %v696 = vpop.f32.mrf.mxu0
  %v697 = vadd.f32 0.0, %v696
  %v698 = vpop.f32.mrf.mxu0
  %v699 = vadd.f32 0.0, %v698
  %700 = vdwg.mxu0
  %v701 = vadd.f32 %v438, %v626
  %v702 = vadd.f32 %v440, %v628
  %v703 = vadd.f32 %v509, %v697
  %v704 = vadd.f32 %v511, %v699
  %705 = vrot.lane.b32.xlu0 %v14, 1
  %v706 = vpop.permute.xlu0 %705
  %707 = vrot.lane.b32.xlu0 %v18, 1
  %v708 = vpop.permute.xlu0 %707
  %709 = vrot.lane.b32.xlu0 %v16, 1
  %v710 = vpop.permute.xlu0 %709
  %711 = vrot.lane.b32.xlu0 %v21, 1
  %v712 = vpop.permute.xlu0 %711
  %vm713 = vcmp.lt.s32.totalorder %v24, 1
  %v714 = vsel %vm713, %v710, %v712
  %v715 = vsel %vm713, %v708, %v710
  %v716 = vsel %vm713, %v706, %v708
  %v717 = vsel %vm713, %v712, %v706
  %v718 = vsel %vm132, 1, 0
  %v719 = vsel %vm133, 1, 0
  %v720 = vsel %vm134, 1, 0
  %v721 = vsel %vm135, 1, 0
  %vm722 = vcmp.eq.s32.totalorder %v718, 1
  %vm723 = vcmp.eq.s32.totalorder %v719, 1
  %vm724 = vcmp.eq.s32.totalorder %v720, 1
  %vm725 = vcmp.eq.s32.totalorder %v721, 1
  %v726 = vsel %vm722, %v717, 0.0
  %v727 = vsel %vm723, %v716, 0.0
  %v728 = vsel %vm724, %v715, 0.0
  %v729 = vsel %vm725, %v714, 0.0
  %s730 = scalar_lea.vmem %s1, 12
  %v731 = vld [vmem:[%s730] sm:$0x7]
  %v733 = vsel %vm197, %v731, 0
  %v736 = vsel %vm201, %v726, 0
  %v739 = vsel %vm201, %v727, 0
  %v742 = vsel %vm201, %v728, 0
  %v745 = vsel %vm201, %v729, 0
  %747 = vmatprep.subr.mxu0 0.0
  %748 = vmatpush1.msra.mxu0 0.0
  %749 = vmatprep.subr.mxu0 0.0
  %750 = vmatpush1.msra.mxu0 0.0
  %751 = vmatprep.subr.mxu0 0.0
  %752 = vmatpush1.msra.mxu0 0.0
  %753 = vmatprep.subr.mxu0 0.0
  %754 = vmatpush1.msra.mxu0 0.0
  %755 = vmatprep.subr.mxu0 0.0
  %756 = vmatpush1.msra.mxu0 0.0
  %757 = vmatprep.subr.mxu0 0.0
  %758 = vmatpush1.msra.mxu0 0.0
  %759 = vmatprep.subr.mxu0 0.0
  %760 = vmatpush1.msra.mxu0 0.0
  %761 = vmatprep.subr.mxu0 0.0
  %762 = vmatpush1.msra.mxu0 0.0
  %763 = vmatprep.subr.mxu0 0.0
  %764 = vmatpush1.msra.mxu0 0.0
  %765 = vmatprep.subr.mxu0 0.0
  %766 = vmatpush1.msra.mxu0 0.0
  %767 = vmatprep.subr.mxu0 0.0
  %768 = vmatpush1.msra.mxu0 0.0
  %769 = vmatprep.subr.mxu0 0.0
  %770 = vmatpush1.msra.mxu0 0.0
  %771 = vmatprep.subr.mxu0 0.0
  %772 = vmatpush1.msra.mxu0 0.0
  %773 = vmatprep.subr.mxu0 0.0
  %774 = vmatpush1.msra.mxu0 0.0
  %775 = vmatprep.subr.mxu0 0.0
  %776 = vmatpush1.msra.mxu0 0.0
  %777 = vmatprep.subr.mxu0 %v739
  %778 = vmatpush1.msra.mxu0 %v736
  %779 = vmatprep.subr.mxu0 0.0
  %780 = vmatpush2.msra.mxu0 0.0
  %781 = vmatprep.subr.mxu0 0.0
  %782 = vmatpush2.msra.mxu0 0.0
  %783 = vmatprep.subr.mxu0 0.0
  %784 = vmatpush2.msra.mxu0 0.0
  %785 = vmatprep.subr.mxu0 0.0
  %786 = vmatpush2.msra.mxu0 0.0
  %787 = vmatprep.subr.mxu0 0.0
  %788 = vmatpush2.msra.mxu0 0.0
  %789 = vmatprep.subr.mxu0 0.0
  %790 = vmatpush2.msra.mxu0 0.0
  %791 = vmatprep.subr.mxu0 0.0
  %792 = vmatpush2.msra.mxu0 0.0
  %793 = vmatprep.subr.mxu0 0.0
  %794 = vmatpush2.msra.mxu0 0.0
  %795 = vmatprep.subr.mxu0 0.0
  %796 = vmatpush2.msra.mxu0 0.0
  %797 = vmatprep.subr.mxu0 0.0
  %798 = vmatpush2.msra.mxu0 0.0
  %799 = vmatprep.subr.mxu0 0.0
  %800 = vmatpush2.msra.mxu0 0.0
  %801 = vmatprep.subr.mxu0 0.0
  %802 = vmatpush2.msra.mxu0 0.0
  %803 = vmatprep.subr.mxu0 0.0
  %804 = vmatpush2.msra.mxu0 0.0
  %805 = vmatprep.subr.mxu0 0.0
  %806 = vmatpush2.msra.mxu0 0.0
  %807 = vmatprep.subr.mxu0 0.0
  %808 = vmatpush2.msra.mxu0 0.0
  %809 = vmatprep.subr.mxu0 0.0
  %810 = vmatpush2.msra.mxu0 0.0
  %811 = vmatprep.mubr.f32.mxu0 0.0
  %812 = vmatmul.mubr.f32.gmra.mxu0 %v733
  %v813 = vpop.f32.mrf.mxu0
  %v814 = vadd.f32 0.0, %v813
  %v815 = vpop.f32.mrf.mxu0
  %v816 = vadd.f32 0.0, %v815
  %817 = vdwg.mxu0
  %818 = vmatprep.subr.mxu0 0.0
  %819 = vmatpush1.msra.mxu0 0.0
  %820 = vmatprep.subr.mxu0 0.0
  %821 = vmatpush1.msra.mxu0 0.0
  %822 = vmatprep.subr.mxu0 0.0
  %823 = vmatpush1.msra.mxu0 0.0
  %824 = vmatprep.subr.mxu0 0.0
  %825 = vmatpush1.msra.mxu0 0.0
  %826 = vmatprep.subr.mxu0 0.0
  %827 = vmatpush1.msra.mxu0 0.0
  %828 = vmatprep.subr.mxu0 0.0
  %829 = vmatpush1.msra.mxu0 0.0
  %830 = vmatprep.subr.mxu0 0.0
  %831 = vmatpush1.msra.mxu0 0.0
  %832 = vmatprep.subr.mxu0 0.0
  %833 = vmatpush1.msra.mxu0 0.0
  %834 = vmatprep.subr.mxu0 0.0
  %835 = vmatpush1.msra.mxu0 0.0
  %836 = vmatprep.subr.mxu0 0.0
  %837 = vmatpush1.msra.mxu0 0.0
  %838 = vmatprep.subr.mxu0 0.0
  %839 = vmatpush1.msra.mxu0 0.0
  %840 = vmatprep.subr.mxu0 0.0
  %841 = vmatpush1.msra.mxu0 0.0
  %842 = vmatprep.subr.mxu0 0.0
  %843 = vmatpush1.msra.mxu0 0.0
  %844 = vmatprep.subr.mxu0 0.0
  %845 = vmatpush1.msra.mxu0 0.0
  %846 = vmatprep.subr.mxu0 0.0
  %847 = vmatpush1.msra.mxu0 0.0
  %848 = vmatprep.subr.mxu0 %v745
  %849 = vmatpush1.msra.mxu0 %v742
  %850 = vmatprep.subr.mxu0 0.0
  %851 = vmatpush2.msra.mxu0 0.0
  %852 = vmatprep.subr.mxu0 0.0
  %853 = vmatpush2.msra.mxu0 0.0
  %854 = vmatprep.subr.mxu0 0.0
  %855 = vmatpush2.msra.mxu0 0.0
  %856 = vmatprep.subr.mxu0 0.0
  %857 = vmatpush2.msra.mxu0 0.0
  %858 = vmatprep.subr.mxu0 0.0
  %859 = vmatpush2.msra.mxu0 0.0
  %860 = vmatprep.subr.mxu0 0.0
  %861 = vmatpush2.msra.mxu0 0.0
  %862 = vmatprep.subr.mxu0 0.0
  %863 = vmatpush2.msra.mxu0 0.0
  %864 = vmatprep.subr.mxu0 0.0
  %865 = vmatpush2.msra.mxu0 0.0
  %866 = vmatprep.subr.mxu0 0.0
  %867 = vmatpush2.msra.mxu0 0.0
  %868 = vmatprep.subr.mxu0 0.0
  %869 = vmatpush2.msra.mxu0 0.0
  %870 = vmatprep.subr.mxu0 0.0
  %871 = vmatpush2.msra.mxu0 0.0
  %872 = vmatprep.subr.mxu0 0.0
  %873 = vmatpush2.msra.mxu0 0.0
  %874 = vmatprep.subr.mxu0 0.0
  %875 = vmatpush2.msra.mxu0 0.0
  %876 = vmatprep.subr.mxu0 0.0
  %877 = vmatpush2.msra.mxu0 0.0
  %878 = vmatprep.subr.mxu0 0.0
  %879 = vmatpush2.msra.mxu0 0.0
  %880 = vmatprep.subr.mxu0 0.0
  %881 = vmatpush2.msra.mxu0 0.0
  %882 = vmatprep.mubr.f32.mxu0 0.0
  %883 = vmatmul.mubr.f32.gmra.mxu0 %v733
  %v884 = vpop.f32.mrf.mxu0
  %v885 = vadd.f32 0.0, %v884
  %v886 = vpop.f32.mrf.mxu0
  %v887 = vadd.f32 0.0, %v886
  %888 = vdwg.mxu0
  %v889 = vadd.f32 %v701, %v814
  %v890 = vadd.f32 %v702, %v816
  %v891 = vadd.f32 %v703, %v885
  %v892 = vadd.f32 %v704, %v887
  %s893 = scalar_lea.vmem %s1, 16
  %v894 = vld [vmem:[%s893] sm:$0x7]
  %v896 = vsel %vm197, %v894, 0
  %v898 = vsel %vm201, %v14, 0
  %v900 = vsel %vm201, %v18, 0
  %v902 = vsel %vm201, %v16, 0
  %v904 = vsel %vm201, %v21, 0
  %906 = vmatprep.subr.mxu0 0.0
  %907 = vmatpush1.msra.mxu0 0.0
  %908 = vmatprep.subr.mxu0 0.0
  %909 = vmatpush1.msra.mxu0 0.0
  %910 = vmatprep.subr.mxu0 0.0
  %911 = vmatpush1.msra.mxu0 0.0
  %912 = vmatprep.subr.mxu0 0.0
  %913 = vmatpush1.msra.mxu0 0.0
  %914 = vmatprep.subr.mxu0 0.0
  %915 = vmatpush1.msra.mxu0 0.0
  %916 = vmatprep.subr.mxu0 0.0
  %917 = vmatpush1.msra.mxu0 0.0
  %918 = vmatprep.subr.mxu0 0.0
  %919 = vmatpush1.msra.mxu0 0.0
  %920 = vmatprep.subr.mxu0 0.0
  %921 = vmatpush1.msra.mxu0 0.0
  %922 = vmatprep.subr.mxu0 0.0
  %923 = vmatpush1.msra.mxu0 0.0
  %924 = vmatprep.subr.mxu0 0.0
  %925 = vmatpush1.msra.mxu0 0.0
  %926 = vmatprep.subr.mxu0 0.0
  %927 = vmatpush1.msra.mxu0 0.0
  %928 = vmatprep.subr.mxu0 0.0
  %929 = vmatpush1.msra.mxu0 0.0
  %930 = vmatprep.subr.mxu0 0.0
  %931 = vmatpush1.msra.mxu0 0.0
  %932 = vmatprep.subr.mxu0 0.0
  %933 = vmatpush1.msra.mxu0 0.0
  %934 = vmatprep.subr.mxu0 0.0
  %935 = vmatpush1.msra.mxu0 0.0
  %936 = vmatprep.subr.mxu0 %v900
  %937 = vmatpush1.msra.mxu0 %v898
  %938 = vmatprep.subr.mxu0 0.0
  %939 = vmatpush2.msra.mxu0 0.0
  %940 = vmatprep.subr.mxu0 0.0
  %941 = vmatpush2.msra.mxu0 0.0
  %942 = vmatprep.subr.mxu0 0.0
  %943 = vmatpush2.msra.mxu0 0.0
  %944 = vmatprep.subr.mxu0 0.0
  %945 = vmatpush2.msra.mxu0 0.0
  %946 = vmatprep.subr.mxu0 0.0
  %947 = vmatpush2.msra.mxu0 0.0
  %948 = vmatprep.subr.mxu0 0.0
  %949 = vmatpush2.msra.mxu0 0.0
  %950 = vmatprep.subr.mxu0 0.0
  %951 = vmatpush2.msra.mxu0 0.0
  %952 = vmatprep.subr.mxu0 0.0
  %953 = vmatpush2.msra.mxu0 0.0
  %954 = vmatprep.subr.mxu0 0.0
  %955 = vmatpush2.msra.mxu0 0.0
  %956 = vmatprep.subr.mxu0 0.0
  %957 = vmatpush2.msra.mxu0 0.0
  %958 = vmatprep.subr.mxu0 0.0
  %959 = vmatpush2.msra.mxu0 0.0
  %960 = vmatprep.subr.mxu0 0.0
  %961 = vmatpush2.msra.mxu0 0.0
  %962 = vmatprep.subr.mxu0 0.0
  %963 = vmatpush2.msra.mxu0 0.0
  %964 = vmatprep.subr.mxu0 0.0
  %965 = vmatpush2.msra.mxu0 0.0
  %966 = vmatprep.subr.mxu0 0.0
  %967 = vmatpush2.msra.mxu0 0.0
  %968 = vmatprep.subr.mxu0 0.0
  %969 = vmatpush2.msra.mxu0 0.0
  %970 = vmatprep.mubr.f32.mxu0 0.0
  %971 = vmatmul.mubr.f32.gmra.mxu0 %v896
  %v972 = vpop.f32.mrf.mxu0
  %v973 = vadd.f32 0.0, %v972
  %v974 = vpop.f32.mrf.mxu0
  %v975 = vadd.f32 0.0, %v974
  %976 = vdwg.mxu0
  %977 = vmatprep.subr.mxu0 0.0
  %978 = vmatpush1.msra.mxu0 0.0
  %979 = vmatprep.subr.mxu0 0.0
  %980 = vmatpush1.msra.mxu0 0.0
  %981 = vmatprep.subr.mxu0 0.0
  %982 = vmatpush1.msra.mxu0 0.0
  %983 = vmatprep.subr.mxu0 0.0
  %984 = vmatpush1.msra.mxu0 0.0
  %985 = vmatprep.subr.mxu0 0.0
  %986 = vmatpush1.msra.mxu0 0.0
  %987 = vmatprep.subr.mxu0 0.0
  %988 = vmatpush1.msra.mxu0 0.0
  %989 = vmatprep.subr.mxu0 0.0
  %990 = vmatpush1.msra.mxu0 0.0
  %991 = vmatprep.subr.mxu0 0.0
  %992 = vmatpush1.msra.mxu0 0.0
  %993 = vmatprep.subr.mxu0 0.0
  %994 = vmatpush1.msra.mxu0 0.0
  %995 = vmatprep.subr.mxu0 0.0
  %996 = vmatpush1.msra.mxu0 0.0
  %997 = vmatprep.subr.mxu0 0.0
  %998 = vmatpush1.msra.mxu0 0.0
  %999 = vmatprep.subr.mxu0 0.0
  %1000 = vmatpush1.msra.mxu0 0.0
  %1001 = vmatprep.subr.mxu0 0.0
  %1002 = vmatpush1.msra.mxu0 0.0
  %1003 = vmatprep.subr.mxu0 0.0
  %1004 = vmatpush1.msra.mxu0 0.0
  %1005 = vmatprep.subr.mxu0 0.0
  %1006 = vmatpush1.msra.mxu0 0.0
  %1007 = vmatprep.subr.mxu0 %v904
  %1008 = vmatpush1.msra.mxu0 %v902
  %1009 = vmatprep.subr.mxu0 0.0
  %1010 = vmatpush2.msra.mxu0 0.0
  %1011 = vmatprep.subr.mxu0 0.0
  %1012 = vmatpush2.msra.mxu0 0.0
  %1013 = vmatprep.subr.mxu0 0.0
  %1014 = vmatpush2.msra.mxu0 0.0
  %1015 = vmatprep.subr.mxu0 0.0
  %1016 = vmatpush2.msra.mxu0 0.0
  %1017 = vmatprep.subr.mxu0 0.0
  %1018 = vmatpush2.msra.mxu0 0.0
  %1019 = vmatprep.subr.mxu0 0.0
  %1020 = vmatpush2.msra.mxu0 0.0
  %1021 = vmatprep.subr.mxu0 0.0
  %1022 = vmatpush2.msra.mxu0 0.0
  %1023 = vmatprep.subr.mxu0 0.0
  %1024 = vmatpush2.msra.mxu0 0.0
  %1025 = vmatprep.subr.mxu0 0.0
  %1026 = vmatpush2.msra.mxu0 0.0
  %1027 = vmatprep.subr.mxu0 0.0
  %1028 = vmatpush2.msra.mxu0 0.0
  %1029 = vmatprep.subr.mxu0 0.0
  %1030 = vmatpush2.msra.mxu0 0.0
  %1031 = vmatprep.subr.mxu0 0.0
  %1032 = vmatpush2.msra.mxu0 0.0
  %1033 = vmatprep.subr.mxu0 0.0
  %1034 = vmatpush2.msra.mxu0 0.0
  %1035 = vmatprep.subr.mxu0 0.0
  %1036 = vmatpush2.msra.mxu0 0.0
  %1037 = vmatprep.subr.mxu0 0.0
  %1038 = vmatpush2.msra.mxu0 0.0
  %1039 = vmatprep.subr.mxu0 0.0
  %1040 = vmatpush2.msra.mxu0 0.0
  %1041 = vmatprep.mubr.f32.mxu0 0.0
  %1042 = vmatmul.mubr.f32.gmra.mxu0 %v896
  %v1043 = vpop.f32.mrf.mxu0
  %v1044 = vadd.f32 0.0, %v1043
  %v1045 = vpop.f32.mrf.mxu0
  %v1046 = vadd.f32 0.0, %v1045
  %1047 = vdwg.mxu0
  %v1048 = vadd.f32 %v889, %v973
  %v1049 = vadd.f32 %v890, %v975
  %v1050 = vadd.f32 %v891, %v1044
  %v1051 = vadd.f32 %v892, %v1046
  %1052 = vrot.lane.b32.xlu0 %v14, 127
  %v1053 = vpop.permute.xlu0 %1052
  %1054 = vrot.lane.b32.xlu0 %v18, 127
  %v1055 = vpop.permute.xlu0 %1054
  %1056 = vrot.lane.b32.xlu0 %v16, 127
  %v1057 = vpop.permute.xlu0 %1056
  %1058 = vrot.lane.b32.xlu0 %v21, 127
  %v1059 = vpop.permute.xlu0 %1058
  %vm1060 = vcmp.lt.s32.totalorder %v24, 127
  %v1061 = vsel %vm1060, %v1057, %v1059
  %v1062 = vsel %vm1060, %v1055, %v1057
  %v1063 = vsel %vm1060, %v1053, %v1055
  %v1064 = vsel %vm1060, %v1059, %v1053
  %v1065 = vsel %vm136, 1, 0
  %v1066 = vsel %vm137, 1, 0
  %v1067 = vsel %vm138, 1, 0
  %v1068 = vsel %vm139, 1, 0
  %vm1069 = vcmp.eq.s32.totalorder %v1065, 1
  %vm1070 = vcmp.eq.s32.totalorder %v1066, 1
  %vm1071 = vcmp.eq.s32.totalorder %v1067, 1
  %vm1072 = vcmp.eq.s32.totalorder %v1068, 1
  %v1073 = vsel %vm1069, %v1063, 0.0
  %v1074 = vsel %vm1070, %v1062, 0.0
  %v1075 = vsel %vm1071, %v1061, 0.0
  %v1076 = vsel %vm1072, %v1064, 0.0
  %s1077 = scalar_lea.vmem %s1, 20
  %v1078 = vld [vmem:[%s1077] sm:$0x7]
  %v1080 = vsel %vm197, %v1078, 0
  %v1083 = vsel %vm201, %v1073, 0
  %v1086 = vsel %vm201, %v1074, 0
  %v1089 = vsel %vm201, %v1075, 0
  %v1092 = vsel %vm201, %v1076, 0
  %1094 = vmatprep.subr.mxu0 0.0
  %1095 = vmatpush1.msra.mxu0 0.0
  %1096 = vmatprep.subr.mxu0 0.0
  %1097 = vmatpush1.msra.mxu0 0.0
  %1098 = vmatprep.subr.mxu0 0.0
  %1099 = vmatpush1.msra.mxu0 0.0
  %1100 = vmatprep.subr.mxu0 0.0
  %1101 = vmatpush1.msra.mxu0 0.0
  %1102 = vmatprep.subr.mxu0 0.0
  %1103 = vmatpush1.msra.mxu0 0.0
  %1104 = vmatprep.subr.mxu0 0.0
  %1105 = vmatpush1.msra.mxu0 0.0
  %1106 = vmatprep.subr.mxu0 0.0
  %1107 = vmatpush1.msra.mxu0 0.0
  %1108 = vmatprep.subr.mxu0 0.0
  %1109 = vmatpush1.msra.mxu0 0.0
  %1110 = vmatprep.subr.mxu0 0.0
  %1111 = vmatpush1.msra.mxu0 0.0
  %1112 = vmatprep.subr.mxu0 0.0
  %1113 = vmatpush1.msra.mxu0 0.0
  %1114 = vmatprep.subr.mxu0 0.0
  %1115 = vmatpush1.msra.mxu0 0.0
  %1116 = vmatprep.subr.mxu0 0.0
  %1117 = vmatpush1.msra.mxu0 0.0
  %1118 = vmatprep.subr.mxu0 0.0
  %1119 = vmatpush1.msra.mxu0 0.0
  %1120 = vmatprep.subr.mxu0 0.0
  %1121 = vmatpush1.msra.mxu0 0.0
  %1122 = vmatprep.subr.mxu0 0.0
  %1123 = vmatpush1.msra.mxu0 0.0
  %1124 = vmatprep.subr.mxu0 %v1086
  %1125 = vmatpush1.msra.mxu0 %v1083
  %1126 = vmatprep.subr.mxu0 0.0
  %1127 = vmatpush2.msra.mxu0 0.0
  %1128 = vmatprep.subr.mxu0 0.0
  %1129 = vmatpush2.msra.mxu0 0.0
  %1130 = vmatprep.subr.mxu0 0.0
  %1131 = vmatpush2.msra.mxu0 0.0
  %1132 = vmatprep.subr.mxu0 0.0
  %1133 = vmatpush2.msra.mxu0 0.0
  %1134 = vmatprep.subr.mxu0 0.0
  %1135 = vmatpush2.msra.mxu0 0.0
  %1136 = vmatprep.subr.mxu0 0.0
  %1137 = vmatpush2.msra.mxu0 0.0
  %1138 = vmatprep.subr.mxu0 0.0
  %1139 = vmatpush2.msra.mxu0 0.0
  %1140 = vmatprep.subr.mxu0 0.0
  %1141 = vmatpush2.msra.mxu0 0.0
  %1142 = vmatprep.subr.mxu0 0.0
  %1143 = vmatpush2.msra.mxu0 0.0
  %1144 = vmatprep.subr.mxu0 0.0
  %1145 = vmatpush2.msra.mxu0 0.0
  %1146 = vmatprep.subr.mxu0 0.0
  %1147 = vmatpush2.msra.mxu0 0.0
  %1148 = vmatprep.subr.mxu0 0.0
  %1149 = vmatpush2.msra.mxu0 0.0
  %1150 = vmatprep.subr.mxu0 0.0
  %1151 = vmatpush2.msra.mxu0 0.0
  %1152 = vmatprep.subr.mxu0 0.0
  %1153 = vmatpush2.msra.mxu0 0.0
  %1154 = vmatprep.subr.mxu0 0.0
  %1155 = vmatpush2.msra.mxu0 0.0
  %1156 = vmatprep.subr.mxu0 0.0
  %1157 = vmatpush2.msra.mxu0 0.0
  %1158 = vmatprep.mubr.f32.mxu0 0.0
  %1159 = vmatmul.mubr.f32.gmra.mxu0 %v1080
  %v1160 = vpop.f32.mrf.mxu0
  %v1161 = vadd.f32 0.0, %v1160
  %v1162 = vpop.f32.mrf.mxu0
  %v1163 = vadd.f32 0.0, %v1162
  %1164 = vdwg.mxu0
  %1165 = vmatprep.subr.mxu0 0.0
  %1166 = vmatpush1.msra.mxu0 0.0
  %1167 = vmatprep.subr.mxu0 0.0
  %1168 = vmatpush1.msra.mxu0 0.0
  %1169 = vmatprep.subr.mxu0 0.0
  %1170 = vmatpush1.msra.mxu0 0.0
  %1171 = vmatprep.subr.mxu0 0.0
  %1172 = vmatpush1.msra.mxu0 0.0
  %1173 = vmatprep.subr.mxu0 0.0
  %1174 = vmatpush1.msra.mxu0 0.0
  %1175 = vmatprep.subr.mxu0 0.0
  %1176 = vmatpush1.msra.mxu0 0.0
  %1177 = vmatprep.subr.mxu0 0.0
  %1178 = vmatpush1.msra.mxu0 0.0
  %1179 = vmatprep.subr.mxu0 0.0
  %1180 = vmatpush1.msra.mxu0 0.0
  %1181 = vmatprep.subr.mxu0 0.0
  %1182 = vmatpush1.msra.mxu0 0.0
  %1183 = vmatprep.subr.mxu0 0.0
  %1184 = vmatpush1.msra.mxu0 0.0
  %1185 = vmatprep.subr.mxu0 0.0
  %1186 = vmatpush1.msra.mxu0 0.0
  %1187 = vmatprep.subr.mxu0 0.0
  %1188 = vmatpush1.msra.mxu0 0.0
  %1189 = vmatprep.subr.mxu0 0.0
  %1190 = vmatpush1.msra.mxu0 0.0
  %1191 = vmatprep.subr.mxu0 0.0
  %1192 = vmatpush1.msra.mxu0 0.0
  %1193 = vmatprep.subr.mxu0 0.0
  %1194 = vmatpush1.msra.mxu0 0.0
  %1195 = vmatprep.subr.mxu0 %v1092
  %1196 = vmatpush1.msra.mxu0 %v1089
  %1197 = vmatprep.subr.mxu0 0.0
  %1198 = vmatpush2.msra.mxu0 0.0
  %1199 = vmatprep.subr.mxu0 0.0
  %1200 = vmatpush2.msra.mxu0 0.0
  %1201 = vmatprep.subr.mxu0 0.0
  %1202 = vmatpush2.msra.mxu0 0.0
  %1203 = vmatprep.subr.mxu0 0.0
  %1204 = vmatpush2.msra.mxu0 0.0
  %1205 = vmatprep.subr.mxu0 0.0
  %1206 = vmatpush2.msra.mxu0 0.0
  %1207 = vmatprep.subr.mxu0 0.0
  %1208 = vmatpush2.msra.mxu0 0.0
  %1209 = vmatprep.subr.mxu0 0.0
  %1210 = vmatpush2.msra.mxu0 0.0
  %1211 = vmatprep.subr.mxu0 0.0
  %1212 = vmatpush2.msra.mxu0 0.0
  %1213 = vmatprep.subr.mxu0 0.0
  %1214 = vmatpush2.msra.mxu0 0.0
  %1215 = vmatprep.subr.mxu0 0.0
  %1216 = vmatpush2.msra.mxu0 0.0
  %1217 = vmatprep.subr.mxu0 0.0
  %1218 = vmatpush2.msra.mxu0 0.0
  %1219 = vmatprep.subr.mxu0 0.0
  %1220 = vmatpush2.msra.mxu0 0.0
  %1221 = vmatprep.subr.mxu0 0.0
  %1222 = vmatpush2.msra.mxu0 0.0
  %1223 = vmatprep.subr.mxu0 0.0
  %1224 = vmatpush2.msra.mxu0 0.0
  %1225 = vmatprep.subr.mxu0 0.0
  %1226 = vmatpush2.msra.mxu0 0.0
  %1227 = vmatprep.subr.mxu0 0.0
  %1228 = vmatpush2.msra.mxu0 0.0
  %1229 = vmatprep.mubr.f32.mxu0 0.0
  %1230 = vmatmul.mubr.f32.gmra.mxu0 %v1080
  %v1231 = vpop.f32.mrf.mxu0
  %v1232 = vadd.f32 0.0, %v1231
  %v1233 = vpop.f32.mrf.mxu0
  %v1234 = vadd.f32 0.0, %v1233
  %1235 = vdwg.mxu0
  %v1236 = vadd.f32 %v1048, %v1161
  %v1237 = vadd.f32 %v1049, %v1163
  %v1238 = vadd.f32 %v1050, %v1232
  %v1239 = vadd.f32 %v1051, %v1234
  %1240 = vrot.lane.b32.xlu0 %v14, 113
  %v1241 = vpop.permute.xlu0 %1240
  %1242 = vrot.lane.b32.xlu0 %v18, 113
  %v1243 = vpop.permute.xlu0 %1242
  %1244 = vrot.lane.b32.xlu0 %v16, 113
  %v1245 = vpop.permute.xlu0 %1244
  %1246 = vrot.lane.b32.xlu0 %v21, 113
  %v1247 = vpop.permute.xlu0 %1246
  %vm1248 = vcmp.lt.s32.totalorder %v24, 113
  %v1249 = vsel %vm1248, %v1245, %v1247
  %v1250 = vsel %vm1248, %v1243, %v1245
  %v1251 = vsel %vm1248, %v1241, %v1243
  %v1252 = vsel %vm1248, %v1247, %v1241
  %vm1253 = vmand %vm128, %vm132
  %vm1254 = vmand %vm129, %vm133
  %vm1255 = vmand %vm130, %vm134
  %vm1256 = vmand %vm131, %vm135
  %v1257 = vsel %vm1253, 1, 0
  %v1258 = vsel %vm1254, 1, 0
  %v1259 = vsel %vm1255, 1, 0
  %v1260 = vsel %vm1256, 1, 0
  %vm1261 = vcmp.eq.s32.totalorder %v1257, 1
  %vm1262 = vcmp.eq.s32.totalorder %v1258, 1
  %vm1263 = vcmp.eq.s32.totalorder %v1259, 1
  %vm1264 = vcmp.eq.s32.totalorder %v1260, 1
  %v1265 = vsel %vm1261, %v1251, 0.0
  %v1266 = vsel %vm1262, %v1250, 0.0
  %v1267 = vsel %vm1263, %v1249, 0.0
  %v1268 = vsel %vm1264, %v1252, 0.0
  %s1269 = scalar_lea.vmem %s1, 24
  %v1270 = vld [vmem:[%s1269] sm:$0x7]
  %v1272 = vsel %vm197, %v1270, 0
  %v1275 = vsel %vm201, %v1265, 0
  %v1278 = vsel %vm201, %v1266, 0
  %v1281 = vsel %vm201, %v1267, 0
  %v1284 = vsel %vm201, %v1268, 0
  %1286 = vmatprep.subr.mxu0 0.0
  %1287 = vmatpush1.msra.mxu0 0.0
  %1288 = vmatprep.subr.mxu0 0.0
  %1289 = vmatpush1.msra.mxu0 0.0
  %1290 = vmatprep.subr.mxu0 0.0
  %1291 = vmatpush1.msra.mxu0 0.0
  %1292 = vmatprep.subr.mxu0 0.0
  %1293 = vmatpush1.msra.mxu0 0.0
  %1294 = vmatprep.subr.mxu0 0.0
  %1295 = vmatpush1.msra.mxu0 0.0
  %1296 = vmatprep.subr.mxu0 0.0
  %1297 = vmatpush1.msra.mxu0 0.0
  %1298 = vmatprep.subr.mxu0 0.0
  %1299 = vmatpush1.msra.mxu0 0.0
  %1300 = vmatprep.subr.mxu0 0.0
  %1301 = vmatpush1.msra.mxu0 0.0
  %1302 = vmatprep.subr.mxu0 0.0
  %1303 = vmatpush1.msra.mxu0 0.0
  %1304 = vmatprep.subr.mxu0 0.0
  %1305 = vmatpush1.msra.mxu0 0.0
  %1306 = vmatprep.subr.mxu0 0.0
  %1307 = vmatpush1.msra.mxu0 0.0
  %1308 = vmatprep.subr.mxu0 0.0
  %1309 = vmatpush1.msra.mxu0 0.0
  %1310 = vmatprep.subr.mxu0 0.0
  %1311 = vmatpush1.msra.mxu0 0.0
  %1312 = vmatprep.subr.mxu0 0.0
  %1313 = vmatpush1.msra.mxu0 0.0
  %1314 = vmatprep.subr.mxu0 0.0
  %1315 = vmatpush1.msra.mxu0 0.0
  %1316 = vmatprep.subr.mxu0 %v1278
  %1317 = vmatpush1.msra.mxu0 %v1275
  %1318 = vmatprep.subr.mxu0 0.0
  %1319 = vmatpush2.msra.mxu0 0.0
  %1320 = vmatprep.subr.mxu0 0.0
  %1321 = vmatpush2.msra.mxu0 0.0
  %1322 = vmatprep.subr.mxu0 0.0
  %1323 = vmatpush2.msra.mxu0 0.0
  %1324 = vmatprep.subr.mxu0 0.0
  %1325 = vmatpush2.msra.mxu0 0.0
  %1326 = vmatprep.subr.mxu0 0.0
  %1327 = vmatpush2.msra.mxu0 0.0
  %1328 = vmatprep.subr.mxu0 0.0
  %1329 = vmatpush2.msra.mxu0 0.0
  %1330 = vmatprep.subr.mxu0 0.0
  %1331 = vmatpush2.msra.mxu0 0.0
  %1332 = vmatprep.subr.mxu0 0.0
  %1333 = vmatpush2.msra.mxu0 0.0
  %1334 = vmatprep.subr.mxu0 0.0
  %1335 = vmatpush2.msra.mxu0 0.0
  %1336 = vmatprep.subr.mxu0 0.0
  %1337 = vmatpush2.msra.mxu0 0.0
  %1338 = vmatprep.subr.mxu0 0.0
  %1339 = vmatpush2.msra.mxu0 0.0
  %1340 = vmatprep.subr.mxu0 0.0
  %1341 = vmatpush2.msra.mxu0 0.0
  %1342 = vmatprep.subr.mxu0 0.0
  %1343 = vmatpush2.msra.mxu0 0.0
  %1344 = vmatprep.subr.mxu0 0.0
  %1345 = vmatpush2.msra.mxu0 0.0
  %1346 = vmatprep.subr.mxu0 0.0
  %1347 = vmatpush2.msra.mxu0 0.0
  %1348 = vmatprep.subr.mxu0 0.0
  %1349 = vmatpush2.msra.mxu0 0.0
  %1350 = vmatprep.mubr.f32.mxu0 0.0
  %1351 = vmatmul.mubr.f32.gmra.mxu0 %v1272
  %v1352 = vpop.f32.mrf.mxu0
  %v1353 = vadd.f32 0.0, %v1352
  %v1354 = vpop.f32.mrf.mxu0
  %v1355 = vadd.f32 0.0, %v1354
  %1356 = vdwg.mxu0
  %1357 = vmatprep.subr.mxu0 0.0
  %1358 = vmatpush1.msra.mxu0 0.0
  %1359 = vmatprep.subr.mxu0 0.0
  %1360 = vmatpush1.msra.mxu0 0.0
  %1361 = vmatprep.subr.mxu0 0.0
  %1362 = vmatpush1.msra.mxu0 0.0
  %1363 = vmatprep.subr.mxu0 0.0
  %1364 = vmatpush1.msra.mxu0 0.0
  %1365 = vmatprep.subr.mxu0 0.0
  %1366 = vmatpush1.msra.mxu0 0.0
  %1367 = vmatprep.subr.mxu0 0.0
  %1368 = vmatpush1.msra.mxu0 0.0
  %1369 = vmatprep.subr.mxu0 0.0
  %1370 = vmatpush1.msra.mxu0 0.0
  %1371 = vmatprep.subr.mxu0 0.0
  %1372 = vmatpush1.msra.mxu0 0.0
  %1373 = vmatprep.subr.mxu0 0.0
  %1374 = vmatpush1.msra.mxu0 0.0
  %1375 = vmatprep.subr.mxu0 0.0
  %1376 = vmatpush1.msra.mxu0 0.0
  %1377 = vmatprep.subr.mxu0 0.0
  %1378 = vmatpush1.msra.mxu0 0.0
  %1379 = vmatprep.subr.mxu0 0.0
  %1380 = vmatpush1.msra.mxu0 0.0
  %1381 = vmatprep.subr.mxu0 0.0
  %1382 = vmatpush1.msra.mxu0 0.0
  %1383 = vmatprep.subr.mxu0 0.0
  %1384 = vmatpush1.msra.mxu0 0.0
  %1385 = vmatprep.subr.mxu0 0.0
  %1386 = vmatpush1.msra.mxu0 0.0
  %1387 = vmatprep.subr.mxu0 %v1284
  %1388 = vmatpush1.msra.mxu0 %v1281
  %1389 = vmatprep.subr.mxu0 0.0
  %1390 = vmatpush2.msra.mxu0 0.0
  %1391 = vmatprep.subr.mxu0 0.0
  %1392 = vmatpush2.msra.mxu0 0.0
  %1393 = vmatprep.subr.mxu0 0.0
  %1394 = vmatpush2.msra.mxu0 0.0
  %1395 = vmatprep.subr.mxu0 0.0
  %1396 = vmatpush2.msra.mxu0 0.0
  %1397 = vmatprep.subr.mxu0 0.0
  %1398 = vmatpush2.msra.mxu0 0.0
  %1399 = vmatprep.subr.mxu0 0.0
  %1400 = vmatpush2.msra.mxu0 0.0
  %1401 = vmatprep.subr.mxu0 0.0
  %1402 = vmatpush2.msra.mxu0 0.0
  %1403 = vmatprep.subr.mxu0 0.0
  %1404 = vmatpush2.msra.mxu0 0.0
  %1405 = vmatprep.subr.mxu0 0.0
  %1406 = vmatpush2.msra.mxu0 0.0
  %1407 = vmatprep.subr.mxu0 0.0
  %1408 = vmatpush2.msra.mxu0 0.0
  %1409 = vmatprep.subr.mxu0 0.0
  %1410 = vmatpush2.msra.mxu0 0.0
  %1411 = vmatprep.subr.mxu0 0.0
  %1412 = vmatpush2.msra.mxu0 0.0
  %1413 = vmatprep.subr.mxu0 0.0
  %1414 = vmatpush2.msra.mxu0 0.0
  %1415 = vmatprep.subr.mxu0 0.0
  %1416 = vmatpush2.msra.mxu0 0.0
  %1417 = vmatprep.subr.mxu0 0.0
  %1418 = vmatpush2.msra.mxu0 0.0
  %1419 = vmatprep.subr.mxu0 0.0
  %1420 = vmatpush2.msra.mxu0 0.0
  %1421 = vmatprep.mubr.f32.mxu0 0.0
  %1422 = vmatmul.mubr.f32.gmra.mxu0 %v1272
  %v1423 = vpop.f32.mrf.mxu0
  %v1424 = vadd.f32 0.0, %v1423
  %v1425 = vpop.f32.mrf.mxu0
  %v1426 = vadd.f32 0.0, %v1425
  %1427 = vdwg.mxu0
  %v1428 = vadd.f32 %v1236, %v1353
  %v1429 = vadd.f32 %v1237, %v1355
  %v1430 = vadd.f32 %v1238, %v1424
  %v1431 = vadd.f32 %v1239, %v1426
  %1432 = vrot.lane.b32.xlu0 %v14, 112
  %v1433 = vpop.permute.xlu0 %1432
  %1434 = vrot.lane.b32.xlu0 %v18, 112
  %v1435 = vpop.permute.xlu0 %1434
  %1436 = vrot.lane.b32.xlu0 %v16, 112
  %v1437 = vpop.permute.xlu0 %1436
  %1438 = vrot.lane.b32.xlu0 %v21, 112
  %v1439 = vpop.permute.xlu0 %1438
  %vm1440 = vcmp.lt.s32.totalorder %v24, 112
  %v1441 = vsel %vm1440, %v1437, %v1439
  %v1442 = vsel %vm1440, %v1435, %v1437
  %v1443 = vsel %vm1440, %v1433, %v1435
  %v1444 = vsel %vm1440, %v1439, %v1433
  %v1445 = vsel %vm128, 1, 0
  %v1446 = vsel %vm129, 1, 0
  %v1447 = vsel %vm130, 1, 0
  %v1448 = vsel %vm131, 1, 0
  %vm1449 = vcmp.eq.s32.totalorder %v1445, 1
  %vm1450 = vcmp.eq.s32.totalorder %v1446, 1
  %vm1451 = vcmp.eq.s32.totalorder %v1447, 1
  %vm1452 = vcmp.eq.s32.totalorder %v1448, 1
  %v1453 = vsel %vm1449, %v1443, 0.0
  %v1454 = vsel %vm1450, %v1442, 0.0
  %v1455 = vsel %vm1451, %v1441, 0.0
  %v1456 = vsel %vm1452, %v1444, 0.0
  %s1457 = scalar_lea.vmem %s1, 28
  %v1458 = vld [vmem:[%s1457] sm:$0x7]
  %v1460 = vsel %vm197, %v1458, 0
  %v1463 = vsel %vm201, %v1453, 0
  %v1466 = vsel %vm201, %v1454, 0
  %v1469 = vsel %vm201, %v1455, 0
  %v1472 = vsel %vm201, %v1456, 0
  %1474 = vmatprep.subr.mxu0 0.0
  %1475 = vmatpush1.msra.mxu0 0.0
  %1476 = vmatprep.subr.mxu0 0.0
  %1477 = vmatpush1.msra.mxu0 0.0
  %1478 = vmatprep.subr.mxu0 0.0
  %1479 = vmatpush1.msra.mxu0 0.0
  %1480 = vmatprep.subr.mxu0 0.0
  %1481 = vmatpush1.msra.mxu0 0.0
  %1482 = vmatprep.subr.mxu0 0.0
  %1483 = vmatpush1.msra.mxu0 0.0
  %1484 = vmatprep.subr.mxu0 0.0
  %1485 = vmatpush1.msra.mxu0 0.0
  %1486 = vmatprep.subr.mxu0 0.0
  %1487 = vmatpush1.msra.mxu0 0.0
  %1488 = vmatprep.subr.mxu0 0.0
  %1489 = vmatpush1.msra.mxu0 0.0
  %1490 = vmatprep.subr.mxu0 0.0
  %1491 = vmatpush1.msra.mxu0 0.0
  %1492 = vmatprep.subr.mxu0 0.0
  %1493 = vmatpush1.msra.mxu0 0.0
  %1494 = vmatprep.subr.mxu0 0.0
  %1495 = vmatpush1.msra.mxu0 0.0
  %1496 = vmatprep.subr.mxu0 0.0
  %1497 = vmatpush1.msra.mxu0 0.0
  %1498 = vmatprep.subr.mxu0 0.0
  %1499 = vmatpush1.msra.mxu0 0.0
  %1500 = vmatprep.subr.mxu0 0.0
  %1501 = vmatpush1.msra.mxu0 0.0
  %1502 = vmatprep.subr.mxu0 0.0
  %1503 = vmatpush1.msra.mxu0 0.0
  %1504 = vmatprep.subr.mxu0 %v1466
  %1505 = vmatpush1.msra.mxu0 %v1463
  %1506 = vmatprep.subr.mxu0 0.0
  %1507 = vmatpush2.msra.mxu0 0.0
  %1508 = vmatprep.subr.mxu0 0.0
  %1509 = vmatpush2.msra.mxu0 0.0
  %1510 = vmatprep.subr.mxu0 0.0
  %1511 = vmatpush2.msra.mxu0 0.0
  %1512 = vmatprep.subr.mxu0 0.0
  %1513 = vmatpush2.msra.mxu0 0.0
  %1514 = vmatprep.subr.mxu0 0.0
  %1515 = vmatpush2.msra.mxu0 0.0
  %1516 = vmatprep.subr.mxu0 0.0
  %1517 = vmatpush2.msra.mxu0 0.0
  %1518 = vmatprep.subr.mxu0 0.0
  %1519 = vmatpush2.msra.mxu0 0.0
  %1520 = vmatprep.subr.mxu0 0.0
  %1521 = vmatpush2.msra.mxu0 0.0
  %1522 = vmatprep.subr.mxu0 0.0
  %1523 = vmatpush2.msra.mxu0 0.0
  %1524 = vmatprep.subr.mxu0 0.0
  %1525 = vmatpush2.msra.mxu0 0.0
  %1526 = vmatprep.subr.mxu0 0.0
  %1527 = vmatpush2.msra.mxu0 0.0
  %1528 = vmatprep.subr.mxu0 0.0
  %1529 = vmatpush2.msra.mxu0 0.0
  %1530 = vmatprep.subr.mxu0 0.0
  %1531 = vmatpush2.msra.mxu0 0.0
  %1532 = vmatprep.subr.mxu0 0.0
  %1533 = vmatpush2.msra.mxu0 0.0
  %1534 = vmatprep.subr.mxu0 0.0
  %1535 = vmatpush2.msra.mxu0 0.0
  %1536 = vmatprep.subr.mxu0 0.0
  %1537 = vmatpush2.msra.mxu0 0.0
  %1538 = vmatprep.mubr.f32.mxu0 0.0
  %1539 = vmatmul.mubr.f32.gmra.mxu0 %v1460
  %v1540 = vpop.f32.mrf.mxu0
  %v1541 = vadd.f32 0.0, %v1540
  %v1542 = vpop.f32.mrf.mxu0
  %v1543 = vadd.f32 0.0, %v1542
  %1544 = vdwg.mxu0
  %1545 = vmatprep.subr.mxu0 0.0
  %1546 = vmatpush1.msra.mxu0 0.0
  %1547 = vmatprep.subr.mxu0 0.0
  %1548 = vmatpush1.msra.mxu0 0.0
  %1549 = vmatprep.subr.mxu0 0.0
  %1550 = vmatpush1.msra.mxu0 0.0
  %1551 = vmatprep.subr.mxu0 0.0
  %1552 = vmatpush1.msra.mxu0 0.0
  %1553 = vmatprep.subr.mxu0 0.0
  %1554 = vmatpush1.msra.mxu0 0.0
  %1555 = vmatprep.subr.mxu0 0.0
  %1556 = vmatpush1.msra.mxu0 0.0
  %1557 = vmatprep.subr.mxu0 0.0
  %1558 = vmatpush1.msra.mxu0 0.0
  %1559 = vmatprep.subr.mxu0 0.0
  %1560 = vmatpush1.msra.mxu0 0.0
  %1561 = vmatprep.subr.mxu0 0.0
  %1562 = vmatpush1.msra.mxu0 0.0
  %1563 = vmatprep.subr.mxu0 0.0
  %1564 = vmatpush1.msra.mxu0 0.0
  %1565 = vmatprep.subr.mxu0 0.0
  %1566 = vmatpush1.msra.mxu0 0.0
  %1567 = vmatprep.subr.mxu0 0.0
  %1568 = vmatpush1.msra.mxu0 0.0
  %1569 = vmatprep.subr.mxu0 0.0
  %1570 = vmatpush1.msra.mxu0 0.0
  %1571 = vmatprep.subr.mxu0 0.0
  %1572 = vmatpush1.msra.mxu0 0.0
  %1573 = vmatprep.subr.mxu0 0.0
  %1574 = vmatpush1.msra.mxu0 0.0
  %1575 = vmatprep.subr.mxu0 %v1472
  %1576 = vmatpush1.msra.mxu0 %v1469
  %1577 = vmatprep.subr.mxu0 0.0
  %1578 = vmatpush2.msra.mxu0 0.0
  %1579 = vmatprep.subr.mxu0 0.0
  %1580 = vmatpush2.msra.mxu0 0.0
  %1581 = vmatprep.subr.mxu0 0.0
  %1582 = vmatpush2.msra.mxu0 0.0
  %1583 = vmatprep.subr.mxu0 0.0
  %1584 = vmatpush2.msra.mxu0 0.0
  %1585 = vmatprep.subr.mxu0 0.0
  %1586 = vmatpush2.msra.mxu0 0.0
  %1587 = vmatprep.subr.mxu0 0.0
  %1588 = vmatpush2.msra.mxu0 0.0
  %1589 = vmatprep.subr.mxu0 0.0
  %1590 = vmatpush2.msra.mxu0 0.0
  %1591 = vmatprep.subr.mxu0 0.0
  %1592 = vmatpush2.msra.mxu0 0.0
  %1593 = vmatprep.subr.mxu0 0.0
  %1594 = vmatpush2.msra.mxu0 0.0
  %1595 = vmatprep.subr.mxu0 0.0
  %1596 = vmatpush2.msra.mxu0 0.0
  %1597 = vmatprep.subr.mxu0 0.0
  %1598 = vmatpush2.msra.mxu0 0.0
  %1599 = vmatprep.subr.mxu0 0.0
  %1600 = vmatpush2.msra.mxu0 0.0
  %1601 = vmatprep.subr.mxu0 0.0
  %1602 = vmatpush2.msra.mxu0 0.0
  %1603 = vmatprep.subr.mxu0 0.0
  %1604 = vmatpush2.msra.mxu0 0.0
  %1605 = vmatprep.subr.mxu0 0.0
  %1606 = vmatpush2.msra.mxu0 0.0
  %1607 = vmatprep.subr.mxu0 0.0
  %1608 = vmatpush2.msra.mxu0 0.0
  %1609 = vmatprep.mubr.f32.mxu0 0.0
  %1610 = vmatmul.mubr.f32.gmra.mxu0 %v1460
  %v1611 = vpop.f32.mrf.mxu0
  %v1612 = vadd.f32 0.0, %v1611
  %v1613 = vpop.f32.mrf.mxu0
  %v1614 = vadd.f32 0.0, %v1613
  %1615 = vdwg.mxu0
  %v1616 = vadd.f32 %v1428, %v1541
  %v1617 = vadd.f32 %v1429, %v1543
  %v1618 = vadd.f32 %v1430, %v1612
  %v1619 = vadd.f32 %v1431, %v1614
  %1620 = vrot.lane.b32.xlu0 %v14, 111
  %v1621 = vpop.permute.xlu0 %1620
  %1622 = vrot.lane.b32.xlu0 %v18, 111
  %v1623 = vpop.permute.xlu0 %1622
  %1624 = vrot.lane.b32.xlu0 %v16, 111
  %v1625 = vpop.permute.xlu0 %1624
  %1626 = vrot.lane.b32.xlu0 %v21, 111
  %v1627 = vpop.permute.xlu0 %1626
  %vm1628 = vcmp.lt.s32.totalorder %v24, 111
  %v1629 = vsel %vm1628, %v1625, %v1627
  %v1630 = vsel %vm1628, %v1623, %v1625
  %v1631 = vsel %vm1628, %v1621, %v1623
  %v1632 = vsel %vm1628, %v1627, %v1621
  %vm1633 = vmand %vm128, %vm136
  %vm1634 = vmand %vm129, %vm137
  %vm1635 = vmand %vm130, %vm138
  %vm1636 = vmand %vm131, %vm139
  %v1637 = vsel %vm1633, 1, 0
  %v1638 = vsel %vm1634, 1, 0
  %v1639 = vsel %vm1635, 1, 0
  %v1640 = vsel %vm1636, 1, 0
  %vm1641 = vcmp.eq.s32.totalorder %v1637, 1
  %vm1642 = vcmp.eq.s32.totalorder %v1638, 1
  %vm1643 = vcmp.eq.s32.totalorder %v1639, 1
  %vm1644 = vcmp.eq.s32.totalorder %v1640, 1
  %v1645 = vsel %vm1641, %v1631, 0.0
  %v1646 = vsel %vm1642, %v1630, 0.0
  %v1647 = vsel %vm1643, %v1629, 0.0
  %v1648 = vsel %vm1644, %v1632, 0.0
  %s1649 = scalar_lea.vmem %s1, 32
  %v1650 = vld [vmem:[%s1649] sm:$0x7]
  %v1652 = vsel %vm197, %v1650, 0
  %v1655 = vsel %vm201, %v1645, 0
  %v1658 = vsel %vm201, %v1646, 0
  %v1661 = vsel %vm201, %v1647, 0
  %v1664 = vsel %vm201, %v1648, 0
  %1666 = vmatprep.subr.mxu0 0.0
  %1667 = vmatpush1.msra.mxu0 0.0
  %1668 = vmatprep.subr.mxu0 0.0
  %1669 = vmatpush1.msra.mxu0 0.0
  %1670 = vmatprep.subr.mxu0 0.0
  %1671 = vmatpush1.msra.mxu0 0.0
  %1672 = vmatprep.subr.mxu0 0.0
  %1673 = vmatpush1.msra.mxu0 0.0
  %1674 = vmatprep.subr.mxu0 0.0
  %1675 = vmatpush1.msra.mxu0 0.0
  %1676 = vmatprep.subr.mxu0 0.0
  %1677 = vmatpush1.msra.mxu0 0.0
  %1678 = vmatprep.subr.mxu0 0.0
  %1679 = vmatpush1.msra.mxu0 0.0
  %1680 = vmatprep.subr.mxu0 0.0
  %1681 = vmatpush1.msra.mxu0 0.0
  %1682 = vmatprep.subr.mxu0 0.0
  %1683 = vmatpush1.msra.mxu0 0.0
  %1684 = vmatprep.subr.mxu0 0.0
  %1685 = vmatpush1.msra.mxu0 0.0
  %1686 = vmatprep.subr.mxu0 0.0
  %1687 = vmatpush1.msra.mxu0 0.0
  %1688 = vmatprep.subr.mxu0 0.0
  %1689 = vmatpush1.msra.mxu0 0.0
  %1690 = vmatprep.subr.mxu0 0.0
  %1691 = vmatpush1.msra.mxu0 0.0
  %1692 = vmatprep.subr.mxu0 0.0
  %1693 = vmatpush1.msra.mxu0 0.0
  %1694 = vmatprep.subr.mxu0 0.0
  %1695 = vmatpush1.msra.mxu0 0.0
  %1696 = vmatprep.subr.mxu0 %v1658
  %1697 = vmatpush1.msra.mxu0 %v1655
  %1698 = vmatprep.subr.mxu0 0.0
  %1699 = vmatpush2.msra.mxu0 0.0
  %1700 = vmatprep.subr.mxu0 0.0
  %1701 = vmatpush2.msra.mxu0 0.0
  %1702 = vmatprep.subr.mxu0 0.0
  %1703 = vmatpush2.msra.mxu0 0.0
  %1704 = vmatprep.subr.mxu0 0.0
  %1705 = vmatpush2.msra.mxu0 0.0
  %1706 = vmatprep.subr.mxu0 0.0
  %1707 = vmatpush2.msra.mxu0 0.0
  %1708 = vmatprep.subr.mxu0 0.0
  %1709 = vmatpush2.msra.mxu0 0.0
  %1710 = vmatprep.subr.mxu0 0.0
  %1711 = vmatpush2.msra.mxu0 0.0
  %1712 = vmatprep.subr.mxu0 0.0
  %1713 = vmatpush2.msra.mxu0 0.0
  %1714 = vmatprep.subr.mxu0 0.0
  %1715 = vmatpush2.msra.mxu0 0.0
  %1716 = vmatprep.subr.mxu0 0.0
  %1717 = vmatpush2.msra.mxu0 0.0
  %1718 = vmatprep.subr.mxu0 0.0
  %1719 = vmatpush2.msra.mxu0 0.0
  %1720 = vmatprep.subr.mxu0 0.0
  %1721 = vmatpush2.msra.mxu0 0.0
  %1722 = vmatprep.subr.mxu0 0.0
  %1723 = vmatpush2.msra.mxu0 0.0
  %1724 = vmatprep.subr.mxu0 0.0
  %1725 = vmatpush2.msra.mxu0 0.0
  %1726 = vmatprep.subr.mxu0 0.0
  %1727 = vmatpush2.msra.mxu0 0.0
  %1728 = vmatprep.subr.mxu0 0.0
  %1729 = vmatpush2.msra.mxu0 0.0
  %1730 = vmatprep.mubr.f32.mxu0 0.0
  %1731 = vmatmul.mubr.f32.gmra.mxu0 %v1652
  %v1732 = vpop.f32.mrf.mxu0
  %v1733 = vadd.f32 0.0, %v1732
  %v1734 = vpop.f32.mrf.mxu0
  %v1735 = vadd.f32 0.0, %v1734
  %1736 = vdwg.mxu0
  %1737 = vmatprep.subr.mxu0 0.0
  %1738 = vmatpush1.msra.mxu0 0.0
  %1739 = vmatprep.subr.mxu0 0.0
  %1740 = vmatpush1.msra.mxu0 0.0
  %1741 = vmatprep.subr.mxu0 0.0
  %1742 = vmatpush1.msra.mxu0 0.0
  %1743 = vmatprep.subr.mxu0 0.0
  %1744 = vmatpush1.msra.mxu0 0.0
  %1745 = vmatprep.subr.mxu0 0.0
  %1746 = vmatpush1.msra.mxu0 0.0
  %1747 = vmatprep.subr.mxu0 0.0
  %1748 = vmatpush1.msra.mxu0 0.0
  %1749 = vmatprep.subr.mxu0 0.0
  %1750 = vmatpush1.msra.mxu0 0.0
  %1751 = vmatprep.subr.mxu0 0.0
  %1752 = vmatpush1.msra.mxu0 0.0
  %1753 = vmatprep.subr.mxu0 0.0
  %1754 = vmatpush1.msra.mxu0 0.0
  %1755 = vmatprep.subr.mxu0 0.0
  %1756 = vmatpush1.msra.mxu0 0.0
  %1757 = vmatprep.subr.mxu0 0.0
  %1758 = vmatpush1.msra.mxu0 0.0
  %1759 = vmatprep.subr.mxu0 0.0
  %1760 = vmatpush1.msra.mxu0 0.0
  %1761 = vmatprep.subr.mxu0 0.0
  %1762 = vmatpush1.msra.mxu0 0.0
  %1763 = vmatprep.subr.mxu0 0.0
  %1764 = vmatpush1.msra.mxu0 0.0
  %1765 = vmatprep.subr.mxu0 0.0
  %1766 = vmatpush1.msra.mxu0 0.0
  %1767 = vmatprep.subr.mxu0 %v1664
  %1768 = vmatpush1.msra.mxu0 %v1661
  %1769 = vmatprep.subr.mxu0 0.0
  %1770 = vmatpush2.msra.mxu0 0.0
  %1771 = vmatprep.subr.mxu0 0.0
  %1772 = vmatpush2.msra.mxu0 0.0
  %1773 = vmatprep.subr.mxu0 0.0
  %1774 = vmatpush2.msra.mxu0 0.0
  %1775 = vmatprep.subr.mxu0 0.0
  %1776 = vmatpush2.msra.mxu0 0.0
  %1777 = vmatprep.subr.mxu0 0.0
  %1778 = vmatpush2.msra.mxu0 0.0
  %1779 = vmatprep.subr.mxu0 0.0
  %1780 = vmatpush2.msra.mxu0 0.0
  %1781 = vmatprep.subr.mxu0 0.0
  %1782 = vmatpush2.msra.mxu0 0.0
  %1783 = vmatprep.subr.mxu0 0.0
  %1784 = vmatpush2.msra.mxu0 0.0
  %1785 = vmatprep.subr.mxu0 0.0
  %1786 = vmatpush2.msra.mxu0 0.0
  %1787 = vmatprep.subr.mxu0 0.0
  %1788 = vmatpush2.msra.mxu0 0.0
  %1789 = vmatprep.subr.mxu0 0.0
  %1790 = vmatpush2.msra.mxu0 0.0
  %1791 = vmatprep.subr.mxu0 0.0
  %1792 = vmatpush2.msra.mxu0 0.0
  %1793 = vmatprep.subr.mxu0 0.0
  %1794 = vmatpush2.msra.mxu0 0.0
  %1795 = vmatprep.subr.mxu0 0.0
  %1796 = vmatpush2.msra.mxu0 0.0
  %1797 = vmatprep.subr.mxu0 0.0
  %1798 = vmatpush2.msra.mxu0 0.0
  %1799 = vmatprep.subr.mxu0 0.0
  %1800 = vmatpush2.msra.mxu0 0.0
  %1801 = vmatprep.mubr.f32.mxu0 0.0
  %1802 = vmatmul.mubr.f32.gmra.mxu0 %v1652
  %v1803 = vpop.f32.mrf.mxu0
  %v1804 = vadd.f32 0.0, %v1803
  %v1805 = vpop.f32.mrf.mxu0
  %v1806 = vadd.f32 0.0, %v1805
  %1807 = vdwg.mxu0
  %v1808 = vadd.f32 %v1616, %v1733
  %v1809 = vadd.f32 %v1617, %v1735
  %v1810 = vadd.f32 %v1618, %v1804
  %v1811 = vadd.f32 %v1619, %v1806
  %v1812 = vld [vmem:[%s2] sm:$0x7]
  %1814 = vset.pattern.permute.xlu0 0
  %1815 = vperm.xlu0 %1814, %v1812
  %v1816 = vpop.permute.xlu0 %1815
  %v1818 = vadd.f32 %v1808, %v1816
  %v1819 = vadd.f32 %v1809, %v1816
  %v1820 = vadd.f32 %v1810, %v1816
  %v1821 = vadd.f32 %v1811, %v1816
  %v1824 = vcombine.low %v1818, %v1819
  %1826 = vst [vmem:[%s3] sm:$0x77] %v1824
  %v1829 = vcombine.low %v1820, %v1821
  %s1831 = scalar_lea.vmem %s3, 8
  %1832 = vst [vmem:[%s1831] sm:$0x77] %v1829
  // Predicated region
  $region14: #{tpu_custom_call.1} parent=0 // pred_check
    _
  $region15: #{tpu_custom_call.1} parent=0 // pred_check_branch
    %1834 = sbr.rel (0) target = $region17
  $region16: #{tpu_custom_call.1} parent=0 // pred_region
    _
  $region17: #{tpu_custom_call.1} parent=0 // pred_fallthru
    _
  // Predicated region
  $region18: #{tpu_custom_call.1} parent=0 // pred_check
    _
  $region19: #{tpu_custom_call.1} parent=0 // pred_check_branch
    %1836 = sbr.rel (0) target = $region21
  $region20: #{tpu_custom_call.1} parent=0 // pred_region
    _
  $region21: #{tpu_custom_call.1} parent=0 // pred_fallthru
    _

</llo_original>
